<compile_context>
chip_gen: v5e
topology: v5e:2x2
jax: 0.10.0
libtpu: 0.0.40
codegen_flags: <defaults>
</compile_context>

<pallas_src>
import math
from functools import partial

import jax
import jax.numpy as jnp
from jax.experimental import pallas as pl
from jax.experimental.pallas import tpu as pltpu

EMB_SIZE = 128            # hard-coded in NoisePredict.__init__
D_PAD = 2 * EMB_SIZE      # lane-aligned width for 129-wide rows (pad to 256)
N_PAD = 128               # lane-aligned output width (var_dim padded to 128)
ROW_ALIGN = 16            # sublane alignment (covers bf16 (16,128) packing)


def _round_up(a, b):
    return -(-a // b) * b


def _cdiv(a, b):
    return -(-a // b)


def _quick_gelu(x):
    # Reference-only (matches torch QuickGELU exactly).
    return x * jax.nn.sigmoid(1.702 * x)


def _bf16_elementwise_default():
    """bf16 EUP/VPU paths exist on v6e/v7x; keep f32 elementwise elsewhere."""
    try:
        kind = jax.devices()[0].device_kind.lower()
    except Exception:
        return False
    return ("v6" in kind) or ("v7" in kind)


def get_timestep_embedding(timesteps, embedding_dim, flip_sin_to_cos=False,
                           downscale_freq_shift=1.0, scale=1.0, max_period=10000):
    """JAX port of the reference sinusoidal timestep embedding (glue)."""
    assert timesteps.ndim == 1
    half_dim = embedding_dim // 2
    # guard against the half_dim == downscale_freq_shift divide-by-zero edge case
    assert half_dim != downscale_freq_shift, "embedding_dim too small"
    exponent = -math.log(max_period) * jnp.arange(half_dim, dtype=jnp.float32)
    exponent = exponent / (half_dim - downscale_freq_shift)
    emb = jnp.exp(exponent)
    emb = timesteps.astype(jnp.float32)[:, None] * emb[None, :]
    emb = scale * emb
    emb = jnp.concatenate([jnp.sin(emb), jnp.cos(emb)], axis=-1)
    if flip_sin_to_cos:
        emb = jnp.concatenate([emb[:, half_dim:], emb[:, :half_dim]], axis=-1)
    if embedding_dim % 2 == 1:
        emb = jnp.pad(emb, ((0, 0), (0, 1)))
    return emb


def noise_predict_kernel(xcon_ref, w_io_ref, w_res_ref, b_ref, out_ref, *,
                         k_in, act_dtype):
    f32 = jnp.float32
    bf16 = jnp.bfloat16

    def gelu(z):
        # QuickGELU with a single EUP tanh push: x*sigmoid(1.702x) = x*0.5*(1+tanh(0.851x)).
        # On v6e/v7x act_dtype is bf16 (2x EUP/VPU rate); f32 on v5e/older.
        z = z.astype(act_dtype)
        return z * (0.5 * (jnp.tanh(0.851 * z) + 1.0))

    xcon = xcon_ref[...]                                   # [tm, k_in] bf16
    xt = xcon[:, k_in - 1:k_in].astype(f32)                # temb scalar channel [tm, 1]

    # condition_emb_layer: Linear + QuickGELU (temb/pad columns hit zero weight rows)
    wc = w_io_ref[0:k_in, :]                               # [k_in, 128] bf16
    bc = b_ref[0:1, 0:EMB_SIZE]
    xh = gelu(jnp.dot(xcon, wc, preferred_element_type=f32) + bc).astype(f32)   # [tm, 128]

    # 3 ResBlocks. Hidden dim is 129 = 128 h-lanes + 1 temb channel, kept split:
    # the 128-lane part drives the MXU (K=128, N=256) and the 129th input
    # channel is a rank-1 VPU outer product against the stored weight row.
    for k in range(3):
        w1 = w_res_ref[2 * k]                              # [128, 256] bf16 (top 128 rows)
        w2 = w_res_ref[2 * k + 1]
        b1 = b_ref[1 + 2 * k:2 + 2 * k, :]                 # [1, 256] f32
        b2 = b_ref[2 + 2 * k:3 + 2 * k, :]
        r1 = b_ref[9 + 2 * k:10 + 2 * k, :]                # W1 row 128 (temb input channel)
        r2 = b_ref[10 + 2 * k:11 + 2 * k, :]
        z1 = (jnp.dot(xh.astype(bf16), w1, preferred_element_type=f32)
              + xt * r1 + b1)                              # [tm, 256]
        ah = gelu(z1[:, 0:EMB_SIZE])
        at = gelu(z1[:, EMB_SIZE:EMB_SIZE + 1]).astype(f32)
        z2 = (jnp.dot(ah.astype(bf16), w2, preferred_element_type=f32)
              + at * r2 + b2)
        xh = xh + gelu(z2[:, 0:EMB_SIZE]).astype(f32)      # f32 residual stream
        xt = xt + gelu(z2[:, EMB_SIZE:EMB_SIZE + 1]).astype(f32)

    # mlp_layer: Linear -> QuickGELU -> Linear (same K-split on the first Linear)
    wm1 = w_io_ref[k_in:k_in + EMB_SIZE, :]                # [128, 128] bf16
    wm2 = w_io_ref[k_in + EMB_SIZE:k_in + 2 * EMB_SIZE, :] # [128, 128] bf16
    bm1 = b_ref[7:8, 0:N_PAD]
    bm2 = b_ref[8:9, 0:N_PAD]
    rm1 = b_ref[15:16, 0:N_PAD]                            # wm1 row 128 (temb channel)
    e = gelu(jnp.dot(xh.astype(bf16), wm1, preferred_element_type=f32)
             + xt * rm1 + bm1)                             # [tm, 128]
    out_ref[...] = (jnp.dot(e.astype(bf16), wm2, preferred_element_type=f32)
                    + bm2).astype(out_ref.dtype)           # lane-dense bf16 store


def init_params(key, var_dim, mip_dim):
    """Deterministic synthetic parameters (torch.nn.Linear-style uniform init)."""
    def linear(k, fin, fout):
        kw, kb = jax.random.split(k)
        bound = 1.0 / math.sqrt(fin)
        w = jax.random.uniform(kw, (fin, fout), jnp.float32, -bound, bound)
        b = jax.random.uniform(kb, (1, fout), jnp.float32, -bound, bound)
        return w, b

    start_size = var_dim + mip_dim
    d = EMB_SIZE + 1
    keys = jax.random.split(key, 9)
    p = {}
    p["wc"], p["bc"] = linear(keys[0], start_size, EMB_SIZE)
    p["w11"], p["b11"] = linear(keys[1], d, d)
    p["w12"], p["b12"] = linear(keys[2], d, d)
    p["w21"], p["b21"] = linear(keys[3], d, d)
    p["w22"], p["b22"] = linear(keys[4], d, d)
    p["w31"], p["b31"] = linear(keys[5], d, d)
    p["w32"], p["b32"] = linear(keys[6], d, d)
    p["wm1"], p["bm1"] = linear(keys[7], d, var_dim)
    p["wm2"], p["bm2"] = linear(keys[8], var_dim, var_dim)
    return p


def pack_params(params):
    """One-time weight packing: lane-aligned shapes, bf16 MXU operands, and
    the 129th-channel (temb) weight rows split out for the rank-1 path."""
    start_size = params["wc"].shape[0]
    var_dim = params["wm2"].shape[0]
    assert params["wc"].shape[1] == EMB_SIZE
    assert var_dim <= N_PAD
    # +1 input column reserved for the stashed temb scalar (hits a zero weight row)
    k_in = _round_up(start_size + 1, 128)

    def pad2(w, rows, cols):
        return jnp.pad(w, ((0, rows - w.shape[0]), (0, cols - w.shape[1])))

    # [cond-emb W | mlp W1 (top 128 input rows) | mlp W2], all 128 lanes wide.
    w_io = jnp.concatenate([
        pad2(params["wc"], k_in, EMB_SIZE),
        pad2(params["wm1"][:EMB_SIZE, :], EMB_SIZE, N_PAD),
        pad2(params["wm2"], EMB_SIZE, N_PAD),
    ], axis=0).astype(jnp.bfloat16)

    # 6 resblock weights, K-split: MXU part = top 128 input rows, padded to 256 lanes.
    res_names = ("w11", "w12", "w21", "w22", "w31", "w32")
    w_res = jnp.stack([
        pad2(params[n][:EMB_SIZE, :], EMB_SIZE, D_PAD) for n in res_names
    ], axis=0).astype(jnp.bfloat16)

    # f32 aux slab [16, 256]: 9 biases + 6 resblock temb-channel weight rows + wm1's.
    def row(v):
        v = v.reshape(1, -1).astype(jnp.float32)
        return jnp.pad(v, ((0, 0), (0, D_PAD - v.shape[1])))

    rows = ([row(params[n]) for n in
             ("bc", "b11", "b12", "b21", "b22", "b31", "b32", "bm1", "bm2")]
            + [row(params[n][EMB_SIZE, :]) for n in res_names]
            + [row(params["wm1"][EMB_SIZE, :])])
    b_slab = jnp.concatenate(rows, axis=0)
    assert b_slab.shape == (16, D_PAD)

    return {"w_io": w_io, "w_res": w_res, "b": b_slab,
            "k_in": k_in, "start_size": start_size, "var_dim": var_dim}


def noise_predict(packed, x, t, condition, *, tm_max=2048, act_dtype=None):
    """x: [B, var_num, var_dim], t: [B], condition: [B, var_num, mip_dim]."""
    assert tm_max % ROW_ALIGN == 0
    B, V, Dv = x.shape
    Dm = condition.shape[-1]
    k_in = packed["k_in"]
    var_dim = packed["var_dim"]
    assert Dv + Dm == packed["start_size"]
    if act_dtype is None:
        act_dtype = jnp.bfloat16 if _bf16_elementwise_default() else jnp.float32
    M = B * V

    # --- plain-JAX glue: concat features, sinusoidal timestep embedding, and
    # stash the per-row temb scalar in the last (zero-weight) input column so
    # the kernel has a single bf16 activation operand. ---
    x_con = jnp.concatenate([x, condition], axis=-1).reshape(M, Dv + Dm)
    temb = get_timestep_embedding(t, V).reshape(M, 1)
    pad_cols = k_in - (Dv + Dm) - 1
    x_con = jnp.concatenate(
        [x_con, jnp.zeros((M, pad_cols), x_con.dtype), temb], axis=-1
    ).astype(jnp.bfloat16)

    # Row tiling: aim for >=2 (even) grid steps so v7x's dual TensorCores both
    # get work, with per-tile rows capped at tm_max (VMEM stays well under the
    # 32 MiB scoped limit).
    M_pad = _round_up(max(M, ROW_ALIGN), ROW_ALIGN)
    if M_pad <= ROW_ALIGN:
        tm, n_tiles = M_pad, 1
    else:
        n_tiles = max(2, _cdiv(M_pad, tm_max))
        n_tiles += n_tiles % 2
        tm = _round_up(_cdiv(M_pad, n_tiles), ROW_ALIGN)
    M_pad = tm * n_tiles
    if M_pad > M:
        x_con = jnp.pad(x_con, ((0, M_pad - M), (0, 0)))

    kernel = partial(noise_predict_kernel, k_in=k_in, act_dtype=act_dtype)
    out = pl.pallas_call(
        kernel,
        grid=(n_tiles,),
        in_specs=[
            pl.BlockSpec((tm, k_in), lambda i: (i, 0)),                       # activations+temb (bf16)
            pl.BlockSpec((k_in + 2 * EMB_SIZE, EMB_SIZE), lambda i: (0, 0)),  # io weight slab (resident)
            pl.BlockSpec((6, EMB_SIZE, D_PAD), lambda i: (0, 0, 0)),          # resblock MXU weights (resident)
            pl.BlockSpec((16, D_PAD), lambda i: (0, 0)),                      # bias + rank-1 rows (resident)
        ],
        out_specs=pl.BlockSpec((tm, N_PAD), lambda i: (i, 0)),                # lane-dense bf16 output
        out_shape=jax.ShapeDtypeStruct((M_pad, N_PAD), jnp.bfloat16),
        compiler_params=pltpu.CompilerParams(
            dimension_semantics=("parallel",),
            vmem_limit_bytes=32 * 1024 * 1024),
    )(x_con, packed["w_io"], packed["w_res"], packed["b"])

    return out[:M, :var_dim].astype(jnp.float32).reshape(B, V, var_dim)


def noise_predict_ref(params, x, t, condition):
    """Plain-JAX f32 reference for validation (matches the torch forward)."""
    B, V, Dv = x.shape
    x_con = jnp.concatenate([x, condition], axis=-1)
    h = _quick_gelu(x_con @ params["wc"] + params["bc"])
    temb = get_timestep_embedding(t, V)[..., None]  # [B, V, 1]
    r = jnp.concatenate([h, temb], axis=-1)

    def resblock(x, w1, b1, w2, b2):
        m = _quick_gelu(x @ w1 + b1)
        m = _quick_gelu(m @ w2 + b2)
        return x + m

    r = resblock(r, params["w11"], params["b11"], params["w12"], params["b12"])
    r = resblock(r, params["w21"], params["b21"], params["w22"], params["b22"])
    r = resblock(r, params["w31"], params["b31"], params["w32"], params["b32"])
    e = _quick_gelu(r @ params["wm1"] + params["bm1"])
    return e @ params["wm2"] + params["bm2"]


if __name__ == "__main__":
    B, var_num, var_dim, mip_dim = 2, 8, 32, 32

    key = jax.random.PRNGKey(0)
    kx, kc, kt, kp = jax.random.split(key, 4)
    x = jax.random.normal(kx, (B, var_num, var_dim), jnp.float32)
    condition = jax.random.normal(kc, (B, var_num, mip_dim), jnp.float32)
    t = jax.random.randint(kt, (B,), 0, 1000).astype(jnp.float32)
    params = init_params(kp, var_dim, mip_dim)

    packed = pack_params(params)
    eps = noise_predict(packed, x, t, condition)
    eps = jax.block_until_ready(eps)

    ref = noise_predict_ref(params, x, t, condition)
    assert eps.shape == (B, var_num, var_dim)
    assert bool(jnp.all(jnp.isfinite(eps)))
    # bf16 MXU inputs + (on v6e/v7x) bf16 elementwise gelu + bf16 output store
    # with f32 accumulation: 3e-2 tolerance absorbs the reduced-precision path.
    assert bool(jnp.allclose(eps, ref, rtol=3e-2, atol=3e-2))
    print("KERNEL_OK")
</pallas_src>

<mosaic_0001>
module attributes {stable_mosaic.version = 11 : i64} {
  func.func @noise_predict_kernel(%arg0: i32, %arg1: memref<16x128xbf16, #tpu.memory_space<vmem>>, %arg2: memref<384x128xbf16, #tpu.memory_space<vmem>>, %arg3: memref<6x128x256xbf16, #tpu.memory_space<vmem>>, %arg4: memref<16x256xf32, #tpu.memory_space<vmem>>, %arg5: memref<16x128xbf16, #tpu.memory_space<vmem>>) attributes {dimension_semantics = [#tpu.dimension_semantics<parallel>], iteration_bounds = array<i64: 1>, scalar_prefetch = 0 : i64, scratch_operands = 0 : i64, tpu.core_type = #tpu.core_type<tc>, window_params = [{transform_indices = @transform_0, window_bounds = array<i64: 16, 128>}, {pipeline_mode = #tpu.pipeline_mode<synchronous>, transform_indices = @transform_1, window_bounds = array<i64: 384, 128>}, {pipeline_mode = #tpu.pipeline_mode<synchronous>, transform_indices = @transform_2, window_bounds = array<i64: 6, 128, 256>}, {pipeline_mode = #tpu.pipeline_mode<synchronous>, transform_indices = @transform_3, window_bounds = array<i64: 16, 256>}, {transform_indices = @transform_4, window_bounds = array<i64: 16, 128>}]} {
    %c0 = arith.constant 0 : index
    %c0_0 = arith.constant 0 : index
    %0 = vector.load %arg1[%c0, %c0_0] : memref<16x128xbf16, #tpu.memory_space<vmem>>, vector<16x128xbf16>
    %1 = vector.extract_strided_slice %0 {offsets = [0, 127], sizes = [16, 1], strides = [1, 1]} : vector<16x128xbf16> to vector<16x1xbf16>
    %2 = arith.extf %1 : vector<16x1xbf16> to vector<16x1xf32>
    %c0_1 = arith.constant 0 : index
    %c0_2 = arith.constant 0 : index
    %3 = vector.load %arg2[%c0_1, %c0_2] : memref<384x128xbf16, #tpu.memory_space<vmem>>, vector<128x128xbf16>
    %c0_3 = arith.constant 0 : index
    %c0_4 = arith.constant 0 : index
    %4 = vector.load %arg4[%c0_3, %c0_4] : memref<16x256xf32, #tpu.memory_space<vmem>>, vector<1x128xf32>
    %cst = arith.constant dense<0.000000e+00> : vector<16x128xf32>
    %5 = tpu.matmul %0, %3, %cst {dimension_numbers = #tpu.dot_dimension_numbers<[1], [0], [0], [1], [0, 0, 1, 1], [], []>} : vector<16x128xbf16>, vector<128x128xbf16>, vector<16x128xf32> -> vector<16x128xf32>
    %6 = vector.broadcast %4 : vector<1x128xf32> to vector<16x128xf32>
    %7 = arith.addf %5, %6 : vector<16x128xf32>
    %cst_5 = arith.constant 8.510000e-01 : f32
    %8 = vector.broadcast %cst_5 : f32 to vector<16x128xf32>
    %9 = arith.mulf %8, %7 : vector<16x128xf32>
    %10 = math.tanh %9 : vector<16x128xf32>
    %cst_6 = arith.constant 1.000000e+00 : f32
    %11 = vector.broadcast %cst_6 : f32 to vector<16x128xf32>
    %12 = arith.addf %10, %11 : vector<16x128xf32>
    %cst_7 = arith.constant 5.000000e-01 : f32
    %13 = vector.broadcast %cst_7 : f32 to vector<16x128xf32>
    %14 = arith.mulf %13, %12 : vector<16x128xf32>
    %15 = arith.mulf %7, %14 : vector<16x128xf32>
    %c0_8 = arith.constant 0 : index
    %c0_9 = arith.constant 0 : index
    %c0_10 = arith.constant 0 : index
    %16 = vector.load %arg3[%c0_8, %c0_9, %c0_10] : memref<6x128x256xbf16, #tpu.memory_space<vmem>>, vector<1x128x256xbf16>
    %17 = vector.shape_cast %16 : vector<1x128x256xbf16> to vector<128x256xbf16>
    %c1 = arith.constant 1 : index
    %c0_11 = arith.constant 0 : index
    %c0_12 = arith.constant 0 : index
    %18 = vector.load %arg3[%c1, %c0_11, %c0_12] : memref<6x128x256xbf16, #tpu.memory_space<vmem>>, vector<1x128x256xbf16>
    %19 = vector.shape_cast %18 : vector<1x128x256xbf16> to vector<128x256xbf16>
    %c1_13 = arith.constant 1 : index
    %c0_14 = arith.constant 0 : index
    %20 = vector.load %arg4[%c1_13, %c0_14] : memref<16x256xf32, #tpu.memory_space<vmem>>, vector<1x256xf32>
    %c2 = arith.constant 2 : index
    %c0_15 = arith.constant 0 : index
    %21 = vector.load %arg4[%c2, %c0_15] : memref<16x256xf32, #tpu.memory_space<vmem>>, vector<1x256xf32>
    %c9 = arith.constant 9 : index
    %c0_16 = arith.constant 0 : index
    %22 = vector.load %arg4[%c9, %c0_16] : memref<16x256xf32, #tpu.memory_space<vmem>>, vector<1x256xf32>
    %c10 = arith.constant 10 : index
    %c0_17 = arith.constant 0 : index
    %23 = vector.load %arg4[%c10, %c0_17] : memref<16x256xf32, #tpu.memory_space<vmem>>, vector<1x256xf32>
    %24 = arith.truncf %15 : vector<16x128xf32> to vector<16x128xbf16>
    %cst_18 = arith.constant dense<0.000000e+00> : vector<16x256xf32>
    %25 = tpu.matmul %24, %17, %cst_18 {dimension_numbers = #tpu.dot_dimension_numbers<[1], [0], [0], [1], [0, 0, 1, 1], [], []>} : vector<16x128xbf16>, vector<128x256xbf16>, vector<16x256xf32> -> vector<16x256xf32>
    %26 = vector.broadcast %2 : vector<16x1xf32> to vector<16x256xf32>
    %27 = vector.broadcast %22 : vector<1x256xf32> to vector<16x256xf32>
    %28 = arith.mulf %26, %27 : vector<16x256xf32>
    %29 = arith.addf %25, %28 : vector<16x256xf32>
    %30 = vector.broadcast %20 : vector<1x256xf32> to vector<16x256xf32>
    %31 = arith.addf %29, %30 : vector<16x256xf32>
    %32 = vector.extract_strided_slice %31 {offsets = [0, 0], sizes = [16, 128], strides = [1, 1]} : vector<16x256xf32> to vector<16x128xf32>
    %cst_19 = arith.constant 8.510000e-01 : f32
    %33 = vector.broadcast %cst_19 : f32 to vector<16x128xf32>
    %34 = arith.mulf %33, %32 : vector<16x128xf32>
    %35 = math.tanh %34 : vector<16x128xf32>
    %cst_20 = arith.constant 1.000000e+00 : f32
    %36 = vector.broadcast %cst_20 : f32 to vector<16x128xf32>
    %37 = arith.addf %35, %36 : vector<16x128xf32>
    %cst_21 = arith.constant 5.000000e-01 : f32
    %38 = vector.broadcast %cst_21 : f32 to vector<16x128xf32>
    %39 = arith.mulf %38, %37 : vector<16x128xf32>
    %40 = arith.mulf %32, %39 : vector<16x128xf32>
    %41 = vector.extract_strided_slice %31 {offsets = [0, 128], sizes = [16, 1], strides = [1, 1]} : vector<16x256xf32> to vector<16x1xf32>
    %cst_22 = arith.constant 8.510000e-01 : f32
    %42 = vector.broadcast %cst_22 : f32 to vector<16x1xf32>
    %43 = arith.mulf %42, %41 : vector<16x1xf32>
    %44 = math.tanh %43 : vector<16x1xf32>
    %cst_23 = arith.constant 1.000000e+00 : f32
    %45 = vector.broadcast %cst_23 : f32 to vector<16x1xf32>
    %46 = arith.addf %44, %45 : vector<16x1xf32>
    %cst_24 = arith.constant 5.000000e-01 : f32
    %47 = vector.broadcast %cst_24 : f32 to vector<16x1xf32>
    %48 = arith.mulf %47, %46 : vector<16x1xf32>
    %49 = arith.mulf %41, %48 : vector<16x1xf32>
    %50 = arith.truncf %40 : vector<16x128xf32> to vector<16x128xbf16>
    %cst_25 = arith.constant dense<0.000000e+00> : vector<16x256xf32>
    %51 = tpu.matmul %50, %19, %cst_25 {dimension_numbers = #tpu.dot_dimension_numbers<[1], [0], [0], [1], [0, 0, 1, 1], [], []>} : vector<16x128xbf16>, vector<128x256xbf16>, vector<16x256xf32> -> vector<16x256xf32>
    %52 = vector.broadcast %49 : vector<16x1xf32> to vector<16x256xf32>
    %53 = vector.broadcast %23 : vector<1x256xf32> to vector<16x256xf32>
    %54 = arith.mulf %52, %53 : vector<16x256xf32>
    %55 = arith.addf %51, %54 : vector<16x256xf32>
    %56 = vector.broadcast %21 : vector<1x256xf32> to vector<16x256xf32>
    %57 = arith.addf %55, %56 : vector<16x256xf32>
    %58 = vector.extract_strided_slice %57 {offsets = [0, 0], sizes = [16, 128], strides = [1, 1]} : vector<16x256xf32> to vector<16x128xf32>
    %cst_26 = arith.constant 8.510000e-01 : f32
    %59 = vector.broadcast %cst_26 : f32 to vector<16x128xf32>
    %60 = arith.mulf %59, %58 : vector<16x128xf32>
    %61 = math.tanh %60 : vector<16x128xf32>
    %cst_27 = arith.constant 1.000000e+00 : f32
    %62 = vector.broadcast %cst_27 : f32 to vector<16x128xf32>
    %63 = arith.addf %61, %62 : vector<16x128xf32>
    %cst_28 = arith.constant 5.000000e-01 : f32
    %64 = vector.broadcast %cst_28 : f32 to vector<16x128xf32>
    %65 = arith.mulf %64, %63 : vector<16x128xf32>
    %66 = arith.mulf %58, %65 : vector<16x128xf32>
    %67 = arith.addf %15, %66 : vector<16x128xf32>
    %68 = vector.extract_strided_slice %57 {offsets = [0, 128], sizes = [16, 1], strides = [1, 1]} : vector<16x256xf32> to vector<16x1xf32>
    %cst_29 = arith.constant 8.510000e-01 : f32
    %69 = vector.broadcast %cst_29 : f32 to vector<16x1xf32>
    %70 = arith.mulf %69, %68 : vector<16x1xf32>
    %71 = math.tanh %70 : vector<16x1xf32>
    %cst_30 = arith.constant 1.000000e+00 : f32
    %72 = vector.broadcast %cst_30 : f32 to vector<16x1xf32>
    %73 = arith.addf %71, %72 : vector<16x1xf32>
    %cst_31 = arith.constant 5.000000e-01 : f32
    %74 = vector.broadcast %cst_31 : f32 to vector<16x1xf32>
    %75 = arith.mulf %74, %73 : vector<16x1xf32>
    %76 = arith.mulf %68, %75 : vector<16x1xf32>
    %77 = arith.addf %2, %76 : vector<16x1xf32>
    %c2_32 = arith.constant 2 : index
    %c0_33 = arith.constant 0 : index
    %c0_34 = arith.constant 0 : index
    %78 = vector.load %arg3[%c2_32, %c0_33, %c0_34] : memref<6x128x256xbf16, #tpu.memory_space<vmem>>, vector<1x128x256xbf16>
    %79 = vector.shape_cast %78 : vector<1x128x256xbf16> to vector<128x256xbf16>
    %c3 = arith.constant 3 : index
    %c0_35 = arith.constant 0 : index
    %c0_36 = arith.constant 0 : index
    %80 = vector.load %arg3[%c3, %c0_35, %c0_36] : memref<6x128x256xbf16, #tpu.memory_space<vmem>>, vector<1x128x256xbf16>
    %81 = vector.shape_cast %80 : vector<1x128x256xbf16> to vector<128x256xbf16>
    %c3_37 = arith.constant 3 : index
    %c0_38 = arith.constant 0 : index
    %82 = vector.load %arg4[%c3_37, %c0_38] : memref<16x256xf32, #tpu.memory_space<vmem>>, vector<1x256xf32>
    %c4 = arith.constant 4 : index
    %c0_39 = arith.constant 0 : index
    %83 = vector.load %arg4[%c4, %c0_39] : memref<16x256xf32, #tpu.memory_space<vmem>>, vector<1x256xf32>
    %c11 = arith.constant 11 : index
    %c0_40 = arith.constant 0 : index
    %84 = vector.load %arg4[%c11, %c0_40] : memref<16x256xf32, #tpu.memory_space<vmem>>, vector<1x256xf32>
    %c12 = arith.constant 12 : index
    %c0_41 = arith.constant 0 : index
    %85 = vector.load %arg4[%c12, %c0_41] : memref<16x256xf32, #tpu.memory_space<vmem>>, vector<1x256xf32>
    %86 = arith.truncf %67 : vector<16x128xf32> to vector<16x128xbf16>
    %cst_42 = arith.constant dense<0.000000e+00> : vector<16x256xf32>
    %87 = tpu.matmul %86, %79, %cst_42 {dimension_numbers = #tpu.dot_dimension_numbers<[1], [0], [0], [1], [0, 0, 1, 1], [], []>} : vector<16x128xbf16>, vector<128x256xbf16>, vector<16x256xf32> -> vector<16x256xf32>
    %88 = vector.broadcast %77 : vector<16x1xf32> to vector<16x256xf32>
    %89 = vector.broadcast %84 : vector<1x256xf32> to vector<16x256xf32>
    %90 = arith.mulf %88, %89 : vector<16x256xf32>
    %91 = arith.addf %87, %90 : vector<16x256xf32>
    %92 = vector.broadcast %82 : vector<1x256xf32> to vector<16x256xf32>
    %93 = arith.addf %91, %92 : vector<16x256xf32>
    %94 = vector.extract_strided_slice %93 {offsets = [0, 0], sizes = [16, 128], strides = [1, 1]} : vector<16x256xf32> to vector<16x128xf32>
    %cst_43 = arith.constant 8.510000e-01 : f32
    %95 = vector.broadcast %cst_43 : f32 to vector<16x128xf32>
    %96 = arith.mulf %95, %94 : vector<16x128xf32>
    %97 = math.tanh %96 : vector<16x128xf32>
    %cst_44 = arith.constant 1.000000e+00 : f32
    %98 = vector.broadcast %cst_44 : f32 to vector<16x128xf32>
    %99 = arith.addf %97, %98 : vector<16x128xf32>
    %cst_45 = arith.constant 5.000000e-01 : f32
    %100 = vector.broadcast %cst_45 : f32 to vector<16x128xf32>
    %101 = arith.mulf %100, %99 : vector<16x128xf32>
    %102 = arith.mulf %94, %101 : vector<16x128xf32>
    %103 = vector.extract_strided_slice %93 {offsets = [0, 128], sizes = [16, 1], strides = [1, 1]} : vector<16x256xf32> to vector<16x1xf32>
    %cst_46 = arith.constant 8.510000e-01 : f32
    %104 = vector.broadcast %cst_46 : f32 to vector<16x1xf32>
    %105 = arith.mulf %104, %103 : vector<16x1xf32>
    %106 = math.tanh %105 : vector<16x1xf32>
    %cst_47 = arith.constant 1.000000e+00 : f32
    %107 = vector.broadcast %cst_47 : f32 to vector<16x1xf32>
    %108 = arith.addf %106, %107 : vector<16x1xf32>
    %cst_48 = arith.constant 5.000000e-01 : f32
    %109 = vector.broadcast %cst_48 : f32 to vector<16x1xf32>
    %110 = arith.mulf %109, %108 : vector<16x1xf32>
    %111 = arith.mulf %103, %110 : vector<16x1xf32>
    %112 = arith.truncf %102 : vector<16x128xf32> to vector<16x128xbf16>
    %cst_49 = arith.constant dense<0.000000e+00> : vector<16x256xf32>
    %113 = tpu.matmul %112, %81, %cst_49 {dimension_numbers = #tpu.dot_dimension_numbers<[1], [0], [0], [1], [0, 0, 1, 1], [], []>} : vector<16x128xbf16>, vector<128x256xbf16>, vector<16x256xf32> -> vector<16x256xf32>
    %114 = vector.broadcast %111 : vector<16x1xf32> to vector<16x256xf32>
    %115 = vector.broadcast %85 : vector<1x256xf32> to vector<16x256xf32>
    %116 = arith.mulf %114, %115 : vector<16x256xf32>
    %117 = arith.addf %113, %116 : vector<16x256xf32>
    %118 = vector.broadcast %83 : vector<1x256xf32> to vector<16x256xf32>
    %119 = arith.addf %117, %118 : vector<16x256xf32>
    %120 = vector.extract_strided_slice %119 {offsets = [0, 0], sizes = [16, 128], strides = [1, 1]} : vector<16x256xf32> to vector<16x128xf32>
    %cst_50 = arith.constant 8.510000e-01 : f32
    %121 = vector.broadcast %cst_50 : f32 to vector<16x128xf32>
    %122 = arith.mulf %121, %120 : vector<16x128xf32>
    %123 = math.tanh %122 : vector<16x128xf32>
    %cst_51 = arith.constant 1.000000e+00 : f32
    %124 = vector.broadcast %cst_51 : f32 to vector<16x128xf32>
    %125 = arith.addf %123, %124 : vector<16x128xf32>
    %cst_52 = arith.constant 5.000000e-01 : f32
    %126 = vector.broadcast %cst_52 : f32 to vector<16x128xf32>
    %127 = arith.mulf %126, %125 : vector<16x128xf32>
    %128 = arith.mulf %120, %127 : vector<16x128xf32>
    %129 = arith.addf %67, %128 : vector<16x128xf32>
    %130 = vector.extract_strided_slice %119 {offsets = [0, 128], sizes = [16, 1], strides = [1, 1]} : vector<16x256xf32> to vector<16x1xf32>
    %cst_53 = arith.constant 8.510000e-01 : f32
    %131 = vector.broadcast %cst_53 : f32 to vector<16x1xf32>
    %132 = arith.mulf %131, %130 : vector<16x1xf32>
    %133 = math.tanh %132 : vector<16x1xf32>
    %cst_54 = arith.constant 1.000000e+00 : f32
    %134 = vector.broadcast %cst_54 : f32 to vector<16x1xf32>
    %135 = arith.addf %133, %134 : vector<16x1xf32>
    %cst_55 = arith.constant 5.000000e-01 : f32
    %136 = vector.broadcast %cst_55 : f32 to vector<16x1xf32>
    %137 = arith.mulf %136, %135 : vector<16x1xf32>
    %138 = arith.mulf %130, %137 : vector<16x1xf32>
    %139 = arith.addf %77, %138 : vector<16x1xf32>
    %c4_56 = arith.constant 4 : index
    %c0_57 = arith.constant 0 : index
    %c0_58 = arith.constant 0 : index
    %140 = vector.load %arg3[%c4_56, %c0_57, %c0_58] : memref<6x128x256xbf16, #tpu.memory_space<vmem>>, vector<1x128x256xbf16>
    %141 = vector.shape_cast %140 : vector<1x128x256xbf16> to vector<128x256xbf16>
    %c5 = arith.constant 5 : index
    %c0_59 = arith.constant 0 : index
    %c0_60 = arith.constant 0 : index
    %142 = vector.load %arg3[%c5, %c0_59, %c0_60] : memref<6x128x256xbf16, #tpu.memory_space<vmem>>, vector<1x128x256xbf16>
    %143 = vector.shape_cast %142 : vector<1x128x256xbf16> to vector<128x256xbf16>
    %c5_61 = arith.constant 5 : index
    %c0_62 = arith.constant 0 : index
    %144 = vector.load %arg4[%c5_61, %c0_62] : memref<16x256xf32, #tpu.memory_space<vmem>>, vector<1x256xf32>
    %c6 = arith.constant 6 : index
    %c0_63 = arith.constant 0 : index
    %145 = vector.load %arg4[%c6, %c0_63] : memref<16x256xf32, #tpu.memory_space<vmem>>, vector<1x256xf32>
    %c13 = arith.constant 13 : index
    %c0_64 = arith.constant 0 : index
    %146 = vector.load %arg4[%c13, %c0_64] : memref<16x256xf32, #tpu.memory_space<vmem>>, vector<1x256xf32>
    %c14 = arith.constant 14 : index
    %c0_65 = arith.constant 0 : index
    %147 = vector.load %arg4[%c14, %c0_65] : memref<16x256xf32, #tpu.memory_space<vmem>>, vector<1x256xf32>
    %148 = arith.truncf %129 : vector<16x128xf32> to vector<16x128xbf16>
    %cst_66 = arith.constant dense<0.000000e+00> : vector<16x256xf32>
    %149 = tpu.matmul %148, %141, %cst_66 {dimension_numbers = #tpu.dot_dimension_numbers<[1], [0], [0], [1], [0, 0, 1, 1], [], []>} : vector<16x128xbf16>, vector<128x256xbf16>, vector<16x256xf32> -> vector<16x256xf32>
    %150 = vector.broadcast %139 : vector<16x1xf32> to vector<16x256xf32>
    %151 = vector.broadcast %146 : vector<1x256xf32> to vector<16x256xf32>
    %152 = arith.mulf %150, %151 : vector<16x256xf32>
    %153 = arith.addf %149, %152 : vector<16x256xf32>
    %154 = vector.broadcast %144 : vector<1x256xf32> to vector<16x256xf32>
    %155 = arith.addf %153, %154 : vector<16x256xf32>
    %156 = vector.extract_strided_slice %155 {offsets = [0, 0], sizes = [16, 128], strides = [1, 1]} : vector<16x256xf32> to vector<16x128xf32>
    %cst_67 = arith.constant 8.510000e-01 : f32
    %157 = vector.broadcast %cst_67 : f32 to vector<16x128xf32>
    %158 = arith.mulf %157, %156 : vector<16x128xf32>
    %159 = math.tanh %158 : vector<16x128xf32>
    %cst_68 = arith.constant 1.000000e+00 : f32
    %160 = vector.broadcast %cst_68 : f32 to vector<16x128xf32>
    %161 = arith.addf %159, %160 : vector<16x128xf32>
    %cst_69 = arith.constant 5.000000e-01 : f32
    %162 = vector.broadcast %cst_69 : f32 to vector<16x128xf32>
    %163 = arith.mulf %162, %161 : vector<16x128xf32>
    %164 = arith.mulf %156, %163 : vector<16x128xf32>
    %165 = vector.extract_strided_slice %155 {offsets = [0, 128], sizes = [16, 1], strides = [1, 1]} : vector<16x256xf32> to vector<16x1xf32>
    %cst_70 = arith.constant 8.510000e-01 : f32
    %166 = vector.broadcast %cst_70 : f32 to vector<16x1xf32>
    %167 = arith.mulf %166, %165 : vector<16x1xf32>
    %168 = math.tanh %167 : vector<16x1xf32>
    %cst_71 = arith.constant 1.000000e+00 : f32
    %169 = vector.broadcast %cst_71 : f32 to vector<16x1xf32>
    %170 = arith.addf %168, %169 : vector<16x1xf32>
    %cst_72 = arith.constant 5.000000e-01 : f32
    %171 = vector.broadcast %cst_72 : f32 to vector<16x1xf32>
    %172 = arith.mulf %171, %170 : vector<16x1xf32>
    %173 = arith.mulf %165, %172 : vector<16x1xf32>
    %174 = arith.truncf %164 : vector<16x128xf32> to vector<16x128xbf16>
    %cst_73 = arith.constant dense<0.000000e+00> : vector<16x256xf32>
    %175 = tpu.matmul %174, %143, %cst_73 {dimension_numbers = #tpu.dot_dimension_numbers<[1], [0], [0], [1], [0, 0, 1, 1], [], []>} : vector<16x128xbf16>, vector<128x256xbf16>, vector<16x256xf32> -> vector<16x256xf32>
    %176 = vector.broadcast %173 : vector<16x1xf32> to vector<16x256xf32>
    %177 = vector.broadcast %147 : vector<1x256xf32> to vector<16x256xf32>
    %178 = arith.mulf %176, %177 : vector<16x256xf32>
    %179 = arith.addf %175, %178 : vector<16x256xf32>
    %180 = vector.broadcast %145 : vector<1x256xf32> to vector<16x256xf32>
    %181 = arith.addf %179, %180 : vector<16x256xf32>
    %182 = vector.extract_strided_slice %181 {offsets = [0, 0], sizes = [16, 128], strides = [1, 1]} : vector<16x256xf32> to vector<16x128xf32>
    %cst_74 = arith.constant 8.510000e-01 : f32
    %183 = vector.broadcast %cst_74 : f32 to vector<16x128xf32>
    %184 = arith.mulf %183, %182 : vector<16x128xf32>
    %185 = math.tanh %184 : vector<16x128xf32>
    %cst_75 = arith.constant 1.000000e+00 : f32
    %186 = vector.broadcast %cst_75 : f32 to vector<16x128xf32>
    %187 = arith.addf %185, %186 : vector<16x128xf32>
    %cst_76 = arith.constant 5.000000e-01 : f32
    %188 = vector.broadcast %cst_76 : f32 to vector<16x128xf32>
    %189 = arith.mulf %188, %187 : vector<16x128xf32>
    %190 = arith.mulf %182, %189 : vector<16x128xf32>
    %191 = arith.addf %129, %190 : vector<16x128xf32>
    %192 = vector.extract_strided_slice %181 {offsets = [0, 128], sizes = [16, 1], strides = [1, 1]} : vector<16x256xf32> to vector<16x1xf32>
    %cst_77 = arith.constant 8.510000e-01 : f32
    %193 = vector.broadcast %cst_77 : f32 to vector<16x1xf32>
    %194 = arith.mulf %193, %192 : vector<16x1xf32>
    %195 = math.tanh %194 : vector<16x1xf32>
    %cst_78 = arith.constant 1.000000e+00 : f32
    %196 = vector.broadcast %cst_78 : f32 to vector<16x1xf32>
    %197 = arith.addf %195, %196 : vector<16x1xf32>
    %cst_79 = arith.constant 5.000000e-01 : f32
    %198 = vector.broadcast %cst_79 : f32 to vector<16x1xf32>
    %199 = arith.mulf %198, %197 : vector<16x1xf32>
    %200 = arith.mulf %192, %199 : vector<16x1xf32>
    %201 = arith.addf %139, %200 : vector<16x1xf32>
    %c128 = arith.constant 128 : index
    %c0_80 = arith.constant 0 : index
    %202 = vector.load %arg2[%c128, %c0_80] : memref<384x128xbf16, #tpu.memory_space<vmem>>, vector<128x128xbf16>
    %c256 = arith.constant 256 : index
    %c0_81 = arith.constant 0 : index
    %203 = vector.load %arg2[%c256, %c0_81] : memref<384x128xbf16, #tpu.memory_space<vmem>>, vector<128x128xbf16>
    %c7 = arith.constant 7 : index
    %c0_82 = arith.constant 0 : index
    %204 = vector.load %arg4[%c7, %c0_82] : memref<16x256xf32, #tpu.memory_space<vmem>>, vector<1x128xf32>
    %c8 = arith.constant 8 : index
    %c0_83 = arith.constant 0 : index
    %205 = vector.load %arg4[%c8, %c0_83] : memref<16x256xf32, #tpu.memory_space<vmem>>, vector<1x128xf32>
    %c15 = arith.constant 15 : index
    %c0_84 = arith.constant 0 : index
    %206 = vector.load %arg4[%c15, %c0_84] : memref<16x256xf32, #tpu.memory_space<vmem>>, vector<1x128xf32>
    %207 = arith.truncf %191 : vector<16x128xf32> to vector<16x128xbf16>
    %cst_85 = arith.constant dense<0.000000e+00> : vector<16x128xf32>
    %208 = tpu.matmul %207, %202, %cst_85 {dimension_numbers = #tpu.dot_dimension_numbers<[1], [0], [0], [1], [0, 0, 1, 1], [], []>} : vector<16x128xbf16>, vector<128x128xbf16>, vector<16x128xf32> -> vector<16x128xf32>
    %209 = vector.broadcast %201 : vector<16x1xf32> to vector<16x128xf32>
    %210 = vector.broadcast %206 : vector<1x128xf32> to vector<16x128xf32>
    %211 = arith.mulf %209, %210 : vector<16x128xf32>
    %212 = arith.addf %208, %211 : vector<16x128xf32>
    %213 = vector.broadcast %204 : vector<1x128xf32> to vector<16x128xf32>
    %214 = arith.addf %212, %213 : vector<16x128xf32>
    %cst_86 = arith.constant 8.510000e-01 : f32
    %215 = vector.broadcast %cst_86 : f32 to vector<16x128xf32>
    %216 = arith.mulf %215, %214 : vector<16x128xf32>
    %217 = math.tanh %216 : vector<16x128xf32>
    %cst_87 = arith.constant 1.000000e+00 : f32
    %218 = vector.broadcast %cst_87 : f32 to vector<16x128xf32>
    %219 = arith.addf %217, %218 : vector<16x128xf32>
    %cst_88 = arith.constant 5.000000e-01 : f32
    %220 = vector.broadcast %cst_88 : f32 to vector<16x128xf32>
    %221 = arith.mulf %220, %219 : vector<16x128xf32>
    %222 = arith.mulf %214, %221 : vector<16x128xf32>
    %223 = arith.truncf %222 : vector<16x128xf32> to vector<16x128xbf16>
    %cst_89 = arith.constant dense<0.000000e+00> : vector<16x128xf32>
    %224 = tpu.matmul %223, %203, %cst_89 {dimension_numbers = #tpu.dot_dimension_numbers<[1], [0], [0], [1], [0, 0, 1, 1], [], []>} : vector<16x128xbf16>, vector<128x128xbf16>, vector<16x128xf32> -> vector<16x128xf32>
    %225 = vector.broadcast %205 : vector<1x128xf32> to vector<16x128xf32>
    %226 = arith.addf %224, %225 : vector<16x128xf32>
    %227 = arith.truncf %226 : vector<16x128xf32> to vector<16x128xbf16>
    %c0_90 = arith.constant 0 : index
    %c0_91 = arith.constant 0 : index
    %228 = vector.load %arg5[%c0_90, %c0_91] : memref<16x128xbf16, #tpu.memory_space<vmem>>, vector<16x128xbf16>
    tpu.vector_store %arg5[%c0_90, %c0_91], %227 {strides = array<i32>} : memref<16x128xbf16, #tpu.memory_space<vmem>>, vector<16x128xbf16>,
    return
  }
  func.func @transform_0(%arg0: i32) -> (i32, i32) {
    %c0_i32 = arith.constant 0 : i32
    %c0_i32_0 = arith.constant 0 : i32
    return %arg0, %c0_i32 : i32, i32
  }
  func.func @transform_1(%arg0: i32) -> (i32, i32) {
    %c0_i32 = arith.constant 0 : i32
    %c0_i32_0 = arith.constant 0 : i32
    %c0_i32_1 = arith.constant 0 : i32
    return %c0_i32, %c0_i32_0 : i32, i32
  }
  func.func @transform_2(%arg0: i32) -> (i32, i32, i32) {
    %c0_i32 = arith.constant 0 : i32
    %c0_i32_0 = arith.constant 0 : i32
    %c0_i32_1 = arith.constant 0 : i32
    %c0_i32_2 = arith.constant 0 : i32
    return %c0_i32, %c0_i32_0, %c0_i32_1 : i32, i32, i32
  }
  func.func @transform_3(%arg0: i32) -> (i32, i32) {
    %c0_i32 = arith.constant 0 : i32
    %c0_i32_0 = arith.constant 0 : i32
    %c0_i32_1 = arith.constant 0 : i32
    return %c0_i32, %c0_i32_0 : i32, i32
  }
  func.func @transform_4(%arg0: i32) -> (i32, i32) {
    %c0_i32 = arith.constant 0 : i32
    %c0_i32_0 = arith.constant 0 : i32
    return %arg0, %c0_i32 : i32, i32
  }
}

</mosaic_0001>

<llo_original>
// kernel: tpu_custom_call.1
$region0: #{tpu_custom_call.1}
  #allocation0 [shape = 'u32[]', space=smem, size = 0x4, offset = 0x4, fixed_abs, tag = 'smem constant byte address 0x4 - core index']
  #allocation1 [shape = 'u32[72,128]{1,0:T(1,128)}', space=vmem, size = 0x9000, scoped, tag = 'internal scratch']
  %s0 = inlined_call_operand.hbm [shape: bf16[16,128], index: 0, kind: input, shape index: {}]
  %s1 = inlined_call_operand.hbm [shape: bf16[384,128], index: 1, kind: input, shape index: {}]
  %s2 = inlined_call_operand.hbm [shape: bf16[6,128,256], index: 2, kind: input, shape index: {}]
  %s3 = inlined_call_operand.hbm [shape: f32[16,256], index: 3, kind: input, shape index: {}]
  %s4 = inlined_call_operand.hbm [shape: bf16[16,128], index: 4, kind: output, shape index: {}]
  %s5 = sld [smem:[#allocation0]]
  $region42: #{tpu_custom_call.1} parent=0
    _
  %s7 = ssub.s32 1, %s5
  %s8 = scalar_select 0, %s7, %s5
  $region1: #{tpu_custom_call.1} parent=0
    #allocation2 [shape = 'u8[4096]{0}', space=vmem, size = 0x1000, scoped, tag = 'input window, operand 0, single buffered']
    #allocation3 [shape = 's32[1]{0}', space=sflag, size = 0x4, scoped, tag = 'scoped memory for tpu_custom_call.1']
    #allocation4 [shape = 's32[1]{0}', space=sflag, size = 0x4, scoped, tag = 'scoped memory for tpu_custom_call.1']
    #allocation5 [shape = 'u8[98304]{0}', space=vmem, size = 0x18000, scoped, tag = 'input window, operand 1, single buffered']
    #allocation6 [shape = 's32[1]{0}', space=sflag, size = 0x4, scoped, tag = 'scoped memory for tpu_custom_call.1']
    #allocation7 [shape = 'u8[393216]{0}', space=vmem, size = 0x60000, scoped, tag = 'input window, operand 2, single buffered']
    #allocation8 [shape = 'u8[16384]{0}', space=vmem, size = 0x4000, scoped, tag = 'input window, operand 3, single buffered']
    #allocation9 [shape = 's32[1]{0}', space=sflag, size = 0x4, scoped, tag = 'scoped memory for tpu_custom_call.1']
    #allocation10 [shape = 'u8[4096]{0}', space=vmem, size = 0x1000, scoped, tag = 'output window, operand 0, single buffered']
    %9 = vsyncpa [#allocation3], 0
    %10 = vsyncpa [#allocation6], 0
    %11 = vsyncpa [#allocation9], 0
    %12 = vsyncpa [#allocation4], 0
    // Predicated region
    $region2: #{tpu_custom_call.1} parent=1 // pred_check
      _
    $region3: #{tpu_custom_call.1} parent=1 // pred_check_branch
      %14 = sbr.rel (0) target = $region5
    $region4: #{tpu_custom_call.1} parent=1 // pred_region
      %16 = vsyncadd [#allocation3], 0
      %s17 = sshll.u32 %s0, 4
      %s18 = int_to_ptr.hbm [resolvable:$true] %s17
      %s19 = sshll.u32 [#allocation2], 4
      %s20 = int_to_ptr.vmem [resolvable:$true] %s19
      %25 = dma.hbm_to_vmem [thread:$0]  %s18, 128, %s20, [#allocation3], 64, 64, 4
    $region5: #{tpu_custom_call.1} parent=1 // pred_fallthru
      _
    // Predicated region
    $region6: #{tpu_custom_call.1} parent=1 // pred_check
      _
    $region7: #{tpu_custom_call.1} parent=1 // pred_check_branch
      %27 = sbr.rel (0) target = $region9
    $region8: #{tpu_custom_call.1} parent=1 // pred_region
      %29 = vsyncadd [#allocation6], 0
      %s30 = sshll.u32 %s1, 4
      %s31 = int_to_ptr.hbm [resolvable:$true] %s30
      %s32 = sshll.u32 [#allocation5], 4
      %s33 = int_to_ptr.vmem [resolvable:$true] %s32
      %38 = dma.hbm_to_vmem [thread:$0]  %s31, 3072, %s33, [#allocation6], 64, 64, 4
    $region9: #{tpu_custom_call.1} parent=1 // pred_fallthru
      _
    // Predicated region
    $region10: #{tpu_custom_call.1} parent=1 // pred_check
      _
    $region11: #{tpu_custom_call.1} parent=1 // pred_check_branch
      %40 = sbr.rel (0) target = $region13
    $region12: #{tpu_custom_call.1} parent=1 // pred_region
      %42 = vsyncadd [#allocation6], 0
      %s43 = sshll.u32 %s2, 4
      %s44 = int_to_ptr.hbm [resolvable:$true] %s43
      %s45 = sshll.u32 [#allocation7], 4
      %s46 = int_to_ptr.vmem [resolvable:$true] %s45
      %51 = dma.hbm_to_vmem [thread:$0]  %s44, 12288, %s46, [#allocation6], 128, 128, 8
    $region13: #{tpu_custom_call.1} parent=1 // pred_fallthru
      _
    // Predicated region
    $region14: #{tpu_custom_call.1} parent=1 // pred_check
      _
    $region15: #{tpu_custom_call.1} parent=1 // pred_check_branch
      %53 = sbr.rel (0) target = $region17
    $region16: #{tpu_custom_call.1} parent=1 // pred_region
      %55 = vsyncadd [#allocation9], 0
      %s56 = sshll.u32 %s3, 4
      %s57 = int_to_ptr.hbm [resolvable:$true] %s56
      %s58 = sshll.u32 [#allocation8], 4
      %s59 = int_to_ptr.vmem [resolvable:$true] %s58
      %64 = dma.hbm_to_vmem [thread:$0]  %s57, 512, %s59, [#allocation9], 256, 256, 16
    $region17: #{tpu_custom_call.1} parent=1 // pred_fallthru
      _
    // Predicated region
    $region18: #{tpu_custom_call.1} parent=1 // pred_check
      _
    $region19: #{tpu_custom_call.1} parent=1 // pred_check_branch
      %66 = sbr.rel (0) target = $region21
    $region20: #{tpu_custom_call.1} parent=1 // pred_region
      %68 = dma.done [#allocation3], 128
    $region21: #{tpu_custom_call.1} parent=1 // pred_fallthru
      _
    // Predicated region
    $region22: #{tpu_custom_call.1} parent=1 // pred_check
      _
    $region23: #{tpu_custom_call.1} parent=1 // pred_check_branch
      %70 = sbr.rel (0) target = $region25
    $region24: #{tpu_custom_call.1} parent=1 // pred_region
      %72 = dma.done [#allocation6], 3072
    $region25: #{tpu_custom_call.1} parent=1 // pred_fallthru
      _
    // Predicated region
    $region26: #{tpu_custom_call.1} parent=1 // pred_check
      _
    $region27: #{tpu_custom_call.1} parent=1 // pred_check_branch
      %74 = sbr.rel (0) target = $region29
    $region28: #{tpu_custom_call.1} parent=1 // pred_region
      %76 = dma.done [#allocation6], 12288
    $region29: #{tpu_custom_call.1} parent=1 // pred_fallthru
      _
    // Predicated region
    $region30: #{tpu_custom_call.1} parent=1 // pred_check
      _
    $region31: #{tpu_custom_call.1} parent=1 // pred_check_branch
      %78 = sbr.rel (0) target = $region33
    $region32: #{tpu_custom_call.1} parent=1 // pred_region
      %80 = dma.done [#allocation9], 512
    $region33: #{tpu_custom_call.1} parent=1 // pred_fallthru
      _
    %v81 = vld [vmem:[#allocation2] sm:$0xf]
    %v82 = vld [vmem:[#allocation2 + $0x4] sm:$0xf]
    %v83 = vunpack.c.l.bf16 %v81
    %v84 = vunpack.c.l.bf16 %v82
    %v85 = vld [vmem:[#allocation5] sm:$0xf]
    %v86 = vld [vmem:[#allocation5 + $0x4] sm:$0xf]
    %v87 = vld [vmem:[#allocation5 + $0x8] sm:$0xf]
    %v88 = vld [vmem:[#allocation5 + $0xc] sm:$0xf]
    %v89 = vld [vmem:[#allocation5 + $0x10] sm:$0xf]
    %v90 = vld [vmem:[#allocation5 + $0x14] sm:$0xf]
    %v91 = vld [vmem:[#allocation5 + $0x18] sm:$0xf]
    %v92 = vld [vmem:[#allocation5 + $0x1c] sm:$0xf]
    %v93 = vld [vmem:[#allocation5 + $0x20] sm:$0xf]
    %v94 = vld [vmem:[#allocation5 + $0x24] sm:$0xf]
    %v95 = vld [vmem:[#allocation5 + $0x28] sm:$0xf]
    %v96 = vld [vmem:[#allocation5 + $0x2c] sm:$0xf]
    %v97 = vld [vmem:[#allocation5 + $0x30] sm:$0xf]
    %v98 = vld [vmem:[#allocation5 + $0x34] sm:$0xf]
    %v99 = vld [vmem:[#allocation5 + $0x38] sm:$0xf]
    %v100 = vld [vmem:[#allocation5 + $0x3c] sm:$0xf]
    %v101 = vld [vmem:[#allocation8] ss:$0 sm:$0xff]
    %v104 = vunpack.c.l.b16 %v81
    %v105 = vunpack.c.l.b16 %v82
    %v106 = vpack.c.b16 %v105, %v104
    %v124 = vunpack.c.l.b16 %v85
    %v125 = vunpack.c.l.b16 %v86
    %v126 = vunpack.c.l.b16 %v87
    %v127 = vunpack.c.l.b16 %v88
    %v128 = vunpack.c.l.b16 %v89
    %v129 = vunpack.c.l.b16 %v90
    %v130 = vunpack.c.l.b16 %v91
    %v131 = vunpack.c.l.b16 %v92
    %v132 = vunpack.c.l.b16 %v93
    %v133 = vunpack.c.l.b16 %v94
    %v134 = vunpack.c.l.b16 %v95
    %v135 = vunpack.c.l.b16 %v96
    %v136 = vunpack.c.l.b16 %v97
    %v137 = vunpack.c.l.b16 %v98
    %v138 = vunpack.c.l.b16 %v99
    %v139 = vunpack.c.l.b16 %v100
    %v140 = vpack.c.b16 %v125, %v124
    %v141 = vpack.c.b16 %v127, %v126
    %v142 = vpack.c.b16 %v129, %v128
    %v143 = vpack.c.b16 %v131, %v130
    %v144 = vpack.c.b16 %v133, %v132
    %v145 = vpack.c.b16 %v135, %v134
    %v146 = vpack.c.b16 %v137, %v136
    %v147 = vpack.c.b16 %v139, %v138
    %156 = vmatpush.bf16.msra.mxu0 %v147
    %157 = vmatpush.bf16.msra.mxu0 %v146
    %158 = vmatpush.bf16.msra.mxu0 %v145
    %159 = vmatpush.bf16.msra.mxu0 %v144
    %160 = vmatpush.bf16.msra.mxu0 %v143
    %161 = vmatpush.bf16.msra.mxu0 %v142
    %162 = vmatpush.bf16.msra.mxu0 %v141
    %163 = vmatpush.bf16.msra.mxu0 %v140
    %164 = vmatmul.bf16.gmra.mxu0 %v106
    %v165 = vpop.f32.mrf.mxu0
    %v166 = vadd.f32 %v101, %v165
    %v167 = vpop.f32.mrf.mxu0
    %v168 = vadd.f32 %v101, %v167
    %169 = vdwg.mxu0
    %v170 = vmul.f32 %v166, 0.851
    %v171 = vmul.f32 %v168, 0.851
    %v172 = vtanh.pop %v170
    %v173 = vtanh.pop %v171
    %v174 = vadd.f32 %v172, 1.0
    %v175 = vadd.f32 %v173, 1.0
    %v176 = vmul.f32 %v174, 0.5
    %v177 = vmul.f32 %v175, 0.5
    %v178 = vmul.f32 %v166, %v176
    %v179 = vmul.f32 %v168, %v177
    %v180 = vld [vmem:[#allocation7] sm:$0xff]
    %v181 = vld [vmem:[#allocation7 + $0x8] sm:$0xff]
    %v182 = vld [vmem:[#allocation7 + $0x10] sm:$0xff]
    %v183 = vld [vmem:[#allocation7 + $0x18] sm:$0xff]
    %v184 = vld [vmem:[#allocation7 + $0x20] sm:$0xff]
    %v185 = vld [vmem:[#allocation7 + $0x28] sm:$0xff]
    %v186 = vld [vmem:[#allocation7 + $0x30] sm:$0xff]
    %v187 = vld [vmem:[#allocation7 + $0x38] sm:$0xff]
    %v188 = vld [vmem:[#allocation7 + $0x40] sm:$0xff]
    %v189 = vld [vmem:[#allocation7 + $0x48] sm:$0xff]
    %v190 = vld [vmem:[#allocation7 + $0x50] sm:$0xff]
    %v191 = vld [vmem:[#allocation7 + $0x58] sm:$0xff]
    %v192 = vld [vmem:[#allocation7 + $0x60] sm:$0xff]
    %v193 = vld [vmem:[#allocation7 + $0x68] sm:$0xff]
    %v194 = vld [vmem:[#allocation7 + $0x70] sm:$0xff]
    %v195 = vld [vmem:[#allocation7 + $0x78] sm:$0xff]
    %s196 = scalar_lea.vmem [#allocation7], 128
    %v197 = vld [vmem:[%s196] sm:$0xff]
    %v198 = vld [vmem:[%s196 + $0x8] sm:$0xff]
    %v199 = vld [vmem:[%s196 + $0x10] sm:$0xff]
    %v200 = vld [vmem:[%s196 + $0x18] sm:$0xff]
    %v201 = vld [vmem:[%s196 + $0x20] sm:$0xff]
    %v202 = vld [vmem:[%s196 + $0x28] sm:$0xff]
    %v203 = vld [vmem:[%s196 + $0x30] sm:$0xff]
    %v204 = vld [vmem:[%s196 + $0x38] sm:$0xff]
    %v205 = vld [vmem:[%s196 + $0x40] sm:$0xff]
    %v206 = vld [vmem:[%s196 + $0x48] sm:$0xff]
    %v207 = vld [vmem:[%s196 + $0x50] sm:$0xff]
    %v208 = vld [vmem:[%s196 + $0x58] sm:$0xff]
    %v209 = vld [vmem:[%s196 + $0x60] sm:$0xff]
    %v210 = vld [vmem:[%s196 + $0x68] sm:$0xff]
    %v211 = vld [vmem:[%s196 + $0x70] sm:$0xff]
    %v212 = vld [vmem:[%s196 + $0x78] sm:$0xff]
    %s213 = scalar_lea.vmem [#allocation8], 1
    %v214 = vld [vmem:[%s213] ss:$8 sm:$0x3]
    %s215 = scalar_lea.vmem [#allocation8], 2
    %v216 = vld [vmem:[%s215] ss:$8 sm:$0x3]
    %s217 = scalar_lea.vmem [#allocation8], 17
    %v218 = vld [vmem:[%s217] ss:$8 sm:$0x3]
    %s219 = scalar_lea.vmem [#allocation8], 18
    %v220 = vld [vmem:[%s219] ss:$8 sm:$0x3]
    %v221 = vpack.c.bf16 %v179, %v178
    %223 = vset.pattern.permute.xlu0 127
    %224 = vperm.xlu0 %223, %v83
    %v225 = vpop.permute.xlu0 %224
    %228 = vset.pattern.permute.xlu0 127
    %229 = vperm.xlu0 %228, %v84
    %v230 = vpop.permute.xlu0 %229
    %v233 = vperm.slane %v218, 0
    %v234 = vperm.slane %v218, 1
    %v237 = vmul.f32 %v225, %v233
    %v238 = vmul.f32 %v225, %v234
    %v239 = vmul.f32 %v230, %v233
    %v240 = vmul.f32 %v230, %v234
    %v257 = vunpack.c.l.b16 %v180
    %v258 = vunpack.c.h.b16 %v180
    %v259 = vunpack.c.l.b16 %v181
    %v260 = vunpack.c.h.b16 %v181
    %v261 = vunpack.c.l.b16 %v182
    %v262 = vunpack.c.h.b16 %v182
    %v263 = vunpack.c.l.b16 %v183
    %v264 = vunpack.c.h.b16 %v183
    %v265 = vunpack.c.l.b16 %v184
    %v266 = vunpack.c.h.b16 %v184
    %v267 = vunpack.c.l.b16 %v185
    %v268 = vunpack.c.h.b16 %v185
    %v269 = vunpack.c.l.b16 %v186
    %v270 = vunpack.c.h.b16 %v186
    %v271 = vunpack.c.l.b16 %v187
    %v272 = vunpack.c.h.b16 %v187
    %v273 = vunpack.c.l.b16 %v188
    %v274 = vunpack.c.h.b16 %v188
    %v275 = vunpack.c.l.b16 %v189
    %v276 = vunpack.c.h.b16 %v189
    %v277 = vunpack.c.l.b16 %v190
    %v278 = vunpack.c.h.b16 %v190
    %v279 = vunpack.c.l.b16 %v191
    %v280 = vunpack.c.h.b16 %v191
    %v281 = vunpack.c.l.b16 %v192
    %v282 = vunpack.c.h.b16 %v192
    %v283 = vunpack.c.l.b16 %v193
    %v284 = vunpack.c.h.b16 %v193
    %v285 = vunpack.c.l.b16 %v194
    %v286 = vunpack.c.h.b16 %v194
    %v287 = vunpack.c.l.b16 %v195
    %v288 = vunpack.c.h.b16 %v195
    %v289 = vpack.c.b16 %v259, %v257
    %v290 = vpack.c.b16 %v260, %v258
    %v291 = vpack.c.b16 %v263, %v261
    %v292 = vpack.c.b16 %v264, %v262
    %v293 = vpack.c.b16 %v267, %v265
    %v294 = vpack.c.b16 %v268, %v266
    %v295 = vpack.c.b16 %v271, %v269
    %v296 = vpack.c.b16 %v272, %v270
    %v297 = vpack.c.b16 %v275, %v273
    %v298 = vpack.c.b16 %v276, %v274
    %v299 = vpack.c.b16 %v279, %v277
    %v300 = vpack.c.b16 %v280, %v278
    %v301 = vpack.c.b16 %v283, %v281
    %v302 = vpack.c.b16 %v284, %v282
    %v303 = vpack.c.b16 %v287, %v285
    %v304 = vpack.c.b16 %v288, %v286
    %321 = vmatpush.bf16.msra.mxu0 %v303
    %322 = vmatpush.bf16.msra.mxu0 %v301
    %323 = vmatpush.bf16.msra.mxu0 %v299
    %324 = vmatpush.bf16.msra.mxu0 %v297
    %325 = vmatpush.bf16.msra.mxu0 %v295
    %326 = vmatpush.bf16.msra.mxu0 %v293
    %327 = vmatpush.bf16.msra.mxu0 %v291
    %328 = vmatpush.bf16.msra.mxu0 %v289
    %329 = vmatmul.bf16.gmra.mxu0 %v221
    %v330 = vpop.f32.mrf.mxu0
    %v331 = vadd.f32 %v237, %v330
    %v332 = vpop.f32.mrf.mxu0
    %v333 = vadd.f32 %v239, %v332
    %334 = vdwg.mxu0
    %335 = vmatpush.bf16.msra.mxu0 %v304
    %336 = vmatpush.bf16.msra.mxu0 %v302
    %337 = vmatpush.bf16.msra.mxu0 %v300
    %338 = vmatpush.bf16.msra.mxu0 %v298
    %339 = vmatpush.bf16.msra.mxu0 %v296
    %340 = vmatpush.bf16.msra.mxu0 %v294
    %341 = vmatpush.bf16.msra.mxu0 %v292
    %342 = vmatpush.bf16.msra.mxu0 %v290
    %343 = vmatmul.bf16.gmra.mxu0 %v221
    %v344 = vpop.f32.mrf.mxu0
    %v345 = vadd.f32 %v238, %v344
    %v346 = vpop.f32.mrf.mxu0
    %v347 = vadd.f32 %v240, %v346
    %348 = vdwg.mxu0
    %v350 = vperm.slane %v214, 0
    %v351 = vperm.slane %v214, 1
    %v354 = vadd.f32 %v331, %v350
    %v355 = vadd.f32 %v345, %v351
    %v356 = vadd.f32 %v333, %v350
    %v357 = vadd.f32 %v347, %v351
    %v358 = vmul.f32 %v354, 0.851
    %v359 = vmul.f32 %v356, 0.851
    %v360 = vtanh.pop %v358
    %v361 = vtanh.pop %v359
    %v362 = vadd.f32 %v360, 1.0
    %v363 = vadd.f32 %v361, 1.0
    %v364 = vmul.f32 %v362, 0.5
    %v365 = vmul.f32 %v363, 0.5
    %v366 = vmul.f32 %v354, %v364
    %v367 = vmul.f32 %v356, %v365
    %v368 = vmul.f32 %v355, 0.851
    %v369 = vmul.f32 %v357, 0.851
    %v370 = vtanh.pop %v368
    %v371 = vtanh.pop %v369
    %v372 = vadd.f32 %v370, 1.0
    %v373 = vadd.f32 %v371, 1.0
    %v374 = vmul.f32 %v372, 0.5
    %v375 = vmul.f32 %v373, 0.5
    %v376 = vmul.f32 %v355, %v374
    %v377 = vmul.f32 %v357, %v375
    %v378 = vpack.c.bf16 %v367, %v366
    %380 = vset.pattern.permute.xlu0 0
    %381 = vperm.xlu0 %380, %v376
    %v382 = vpop.permute.xlu0 %381
    %385 = vset.pattern.permute.xlu0 0
    %386 = vperm.xlu0 %385, %v377
    %v387 = vpop.permute.xlu0 %386
    %v390 = vperm.slane %v220, 0
    %v391 = vperm.slane %v220, 1
    %v394 = vmul.f32 %v382, %v390
    %v395 = vmul.f32 %v382, %v391
    %v396 = vmul.f32 %v387, %v390
    %v397 = vmul.f32 %v387, %v391
    %v414 = vunpack.c.l.b16 %v197
    %v415 = vunpack.c.h.b16 %v197
    %v416 = vunpack.c.l.b16 %v198
    %v417 = vunpack.c.h.b16 %v198
    %v418 = vunpack.c.l.b16 %v199
    %v419 = vunpack.c.h.b16 %v199
    %v420 = vunpack.c.l.b16 %v200
    %v421 = vunpack.c.h.b16 %v200
    %v422 = vunpack.c.l.b16 %v201
    %v423 = vunpack.c.h.b16 %v201
    %v424 = vunpack.c.l.b16 %v202
    %v425 = vunpack.c.h.b16 %v202
    %v426 = vunpack.c.l.b16 %v203
    %v427 = vunpack.c.h.b16 %v203
    %v428 = vunpack.c.l.b16 %v204
    %v429 = vunpack.c.h.b16 %v204
    %v430 = vunpack.c.l.b16 %v205
    %v431 = vunpack.c.h.b16 %v205
    %v432 = vunpack.c.l.b16 %v206
    %v433 = vunpack.c.h.b16 %v206
    %v434 = vunpack.c.l.b16 %v207
    %v435 = vunpack.c.h.b16 %v207
    %v436 = vunpack.c.l.b16 %v208
    %v437 = vunpack.c.h.b16 %v208
    %v438 = vunpack.c.l.b16 %v209
    %v439 = vunpack.c.h.b16 %v209
    %v440 = vunpack.c.l.b16 %v210
    %v441 = vunpack.c.h.b16 %v210
    %v442 = vunpack.c.l.b16 %v211
    %v443 = vunpack.c.h.b16 %v211
    %v444 = vunpack.c.l.b16 %v212
    %v445 = vunpack.c.h.b16 %v212
    %v446 = vpack.c.b16 %v416, %v414
    %v447 = vpack.c.b16 %v417, %v415
    %v448 = vpack.c.b16 %v420, %v418
    %v449 = vpack.c.b16 %v421, %v419
    %v450 = vpack.c.b16 %v424, %v422
    %v451 = vpack.c.b16 %v425, %v423
    %v452 = vpack.c.b16 %v428, %v426
    %v453 = vpack.c.b16 %v429, %v427
    %v454 = vpack.c.b16 %v432, %v430
    %v455 = vpack.c.b16 %v433, %v431
    %v456 = vpack.c.b16 %v436, %v434
    %v457 = vpack.c.b16 %v437, %v435
    %v458 = vpack.c.b16 %v440, %v438
    %v459 = vpack.c.b16 %v441, %v439
    %v460 = vpack.c.b16 %v444, %v442
    %v461 = vpack.c.b16 %v445, %v443
    %478 = vmatpush.bf16.msra.mxu0 %v460
    %479 = vmatpush.bf16.msra.mxu0 %v458
    %480 = vmatpush.bf16.msra.mxu0 %v456
    %481 = vmatpush.bf16.msra.mxu0 %v454
    %482 = vmatpush.bf16.msra.mxu0 %v452
    %483 = vmatpush.bf16.msra.mxu0 %v450
    %484 = vmatpush.bf16.msra.mxu0 %v448
    %485 = vmatpush.bf16.msra.mxu0 %v446
    %486 = vmatmul.bf16.gmra.mxu0 %v378
    %v487 = vpop.f32.mrf.mxu0
    %v488 = vadd.f32 %v394, %v487
    %v489 = vpop.f32.mrf.mxu0
    %v490 = vadd.f32 %v396, %v489
    %491 = vdwg.mxu0
    %492 = vmatpush.bf16.msra.mxu0 %v461
    %493 = vmatpush.bf16.msra.mxu0 %v459
    %494 = vmatpush.bf16.msra.mxu0 %v457
    %495 = vmatpush.bf16.msra.mxu0 %v455
    %496 = vmatpush.bf16.msra.mxu0 %v453
    %497 = vmatpush.bf16.msra.mxu0 %v451
    %498 = vmatpush.bf16.msra.mxu0 %v449
    %499 = vmatpush.bf16.msra.mxu0 %v447
    %500 = vmatmul.bf16.gmra.mxu0 %v378
    %v501 = vpop.f32.mrf.mxu0
    %v502 = vadd.f32 %v395, %v501
    %v503 = vpop.f32.mrf.mxu0
    %v504 = vadd.f32 %v397, %v503
    %505 = vdwg.mxu0
    %v507 = vperm.slane %v216, 0
    %v508 = vperm.slane %v216, 1
    %v511 = vadd.f32 %v488, %v507
    %v512 = vadd.f32 %v502, %v508
    %v513 = vadd.f32 %v490, %v507
    %v514 = vadd.f32 %v504, %v508
    %v515 = vmul.f32 %v511, 0.851
    %v516 = vmul.f32 %v513, 0.851
    %v517 = vtanh.pop %v515
    %v518 = vtanh.pop %v516
    %v519 = vadd.f32 %v517, 1.0
    %v520 = vadd.f32 %v518, 1.0
    %v521 = vmul.f32 %v519, 0.5
    %v522 = vmul.f32 %v520, 0.5
    %v523 = vmul.f32 %v511, %v521
    %v524 = vmul.f32 %v513, %v522
    %v525 = vadd.f32 %v178, %v523
    %v526 = vadd.f32 %v179, %v524
    %v527 = vmul.f32 %v512, 0.851
    %v528 = vmul.f32 %v514, 0.851
    %v529 = vtanh.pop %v527
    %v530 = vtanh.pop %v528
    %v531 = vadd.f32 %v529, 1.0
    %v532 = vadd.f32 %v530, 1.0
    %v533 = vmul.f32 %v531, 0.5
    %v534 = vmul.f32 %v532, 0.5
    %v535 = vmul.f32 %v512, %v533
    %v536 = vmul.f32 %v514, %v534
    %539 = vrot.lane.b32.xlu0 %v535, 127
    %v540 = vpop.permute.xlu0 %539
    %541 = vrot.lane.b32.xlu0 %v536, 127
    %v542 = vpop.permute.xlu0 %541
    %v545 = vadd.f32 %v83, %v540
    %v546 = vadd.f32 %v84, %v542
    %s547 = scalar_lea.vmem [#allocation7], 256
    %v548 = vld [vmem:[%s547] sm:$0xff]
    %v549 = vld [vmem:[%s547 + $0x8] sm:$0xff]
    %v550 = vld [vmem:[%s547 + $0x10] sm:$0xff]
    %v551 = vld [vmem:[%s547 + $0x18] sm:$0xff]
    %v552 = vld [vmem:[%s547 + $0x20] sm:$0xff]
    %v553 = vld [vmem:[%s547 + $0x28] sm:$0xff]
    %v554 = vld [vmem:[%s547 + $0x30] sm:$0xff]
    %v555 = vld [vmem:[%s547 + $0x38] sm:$0xff]
    %v556 = vld [vmem:[%s547 + $0x40] sm:$0xff]
    %v557 = vld [vmem:[%s547 + $0x48] sm:$0xff]
    %v558 = vld [vmem:[%s547 + $0x50] sm:$0xff]
    %v559 = vld [vmem:[%s547 + $0x58] sm:$0xff]
    %v560 = vld [vmem:[%s547 + $0x60] sm:$0xff]
    %v561 = vld [vmem:[%s547 + $0x68] sm:$0xff]
    %v562 = vld [vmem:[%s547 + $0x70] sm:$0xff]
    %v563 = vld [vmem:[%s547 + $0x78] sm:$0xff]
    %s564 = scalar_lea.vmem [#allocation7], 384
    %v565 = vld [vmem:[%s564] sm:$0xff]
    %v566 = vld [vmem:[%s564 + $0x8] sm:$0xff]
    %v567 = vld [vmem:[%s564 + $0x10] sm:$0xff]
    %v568 = vld [vmem:[%s564 + $0x18] sm:$0xff]
    %v569 = vld [vmem:[%s564 + $0x20] sm:$0xff]
    %v570 = vld [vmem:[%s564 + $0x28] sm:$0xff]
    %v571 = vld [vmem:[%s564 + $0x30] sm:$0xff]
    %v572 = vld [vmem:[%s564 + $0x38] sm:$0xff]
    %v573 = vld [vmem:[%s564 + $0x40] sm:$0xff]
    %v574 = vld [vmem:[%s564 + $0x48] sm:$0xff]
    %v575 = vld [vmem:[%s564 + $0x50] sm:$0xff]
    %v576 = vld [vmem:[%s564 + $0x58] sm:$0xff]
    %v577 = vld [vmem:[%s564 + $0x60] sm:$0xff]
    %v578 = vld [vmem:[%s564 + $0x68] sm:$0xff]
    %v579 = vld [vmem:[%s564 + $0x70] sm:$0xff]
    %v580 = vld [vmem:[%s564 + $0x78] sm:$0xff]
    %s581 = scalar_lea.vmem [#allocation8], 3
    %v582 = vld [vmem:[%s581] ss:$8 sm:$0x3]
    %s583 = scalar_lea.vmem [#allocation8], 4
    %v584 = vld [vmem:[%s583] ss:$8 sm:$0x3]
    %s585 = scalar_lea.vmem [#allocation8], 19
    %v586 = vld [vmem:[%s585] ss:$8 sm:$0x3]
    %s587 = scalar_lea.vmem [#allocation8], 20
    %v588 = vld [vmem:[%s587] ss:$8 sm:$0x3]
    %v589 = vpack.c.bf16 %v526, %v525
    %591 = vset.pattern.permute.xlu0 127
    %592 = vperm.xlu0 %591, %v545
    %v593 = vpop.permute.xlu0 %592
    %596 = vset.pattern.permute.xlu0 127
    %597 = vperm.xlu0 %596, %v546
    %v598 = vpop.permute.xlu0 %597
    %v601 = vperm.slane %v586, 0
    %v602 = vperm.slane %v586, 1
    %v605 = vmul.f32 %v593, %v601
    %v606 = vmul.f32 %v593, %v602
    %v607 = vmul.f32 %v598, %v601
    %v608 = vmul.f32 %v598, %v602
    %v625 = vunpack.c.l.b16 %v548
    %v626 = vunpack.c.h.b16 %v548
    %v627 = vunpack.c.l.b16 %v549
    %v628 = vunpack.c.h.b16 %v549
    %v629 = vunpack.c.l.b16 %v550
    %v630 = vunpack.c.h.b16 %v550
    %v631 = vunpack.c.l.b16 %v551
    %v632 = vunpack.c.h.b16 %v551
    %v633 = vunpack.c.l.b16 %v552
    %v634 = vunpack.c.h.b16 %v552
    %v635 = vunpack.c.l.b16 %v553
    %v636 = vunpack.c.h.b16 %v553
    %v637 = vunpack.c.l.b16 %v554
    %v638 = vunpack.c.h.b16 %v554
    %v639 = vunpack.c.l.b16 %v555
    %v640 = vunpack.c.h.b16 %v555
    %v641 = vunpack.c.l.b16 %v556
    %v642 = vunpack.c.h.b16 %v556
    %v643 = vunpack.c.l.b16 %v557
    %v644 = vunpack.c.h.b16 %v557
    %v645 = vunpack.c.l.b16 %v558
    %v646 = vunpack.c.h.b16 %v558
    %v647 = vunpack.c.l.b16 %v559
    %v648 = vunpack.c.h.b16 %v559
    %v649 = vunpack.c.l.b16 %v560
    %v650 = vunpack.c.h.b16 %v560
    %v651 = vunpack.c.l.b16 %v561
    %v652 = vunpack.c.h.b16 %v561
    %v653 = vunpack.c.l.b16 %v562
    %v654 = vunpack.c.h.b16 %v562
    %v655 = vunpack.c.l.b16 %v563
    %v656 = vunpack.c.h.b16 %v563
    %v657 = vpack.c.b16 %v627, %v625
    %v658 = vpack.c.b16 %v628, %v626
    %v659 = vpack.c.b16 %v631, %v629
    %v660 = vpack.c.b16 %v632, %v630
    %v661 = vpack.c.b16 %v635, %v633
    %v662 = vpack.c.b16 %v636, %v634
    %v663 = vpack.c.b16 %v639, %v637
    %v664 = vpack.c.b16 %v640, %v638
    %v665 = vpack.c.b16 %v643, %v641
    %v666 = vpack.c.b16 %v644, %v642
    %v667 = vpack.c.b16 %v647, %v645
    %v668 = vpack.c.b16 %v648, %v646
    %v669 = vpack.c.b16 %v651, %v649
    %v670 = vpack.c.b16 %v652, %v650
    %v671 = vpack.c.b16 %v655, %v653
    %v672 = vpack.c.b16 %v656, %v654
    %689 = vmatpush.bf16.msra.mxu0 %v671
    %690 = vmatpush.bf16.msra.mxu0 %v669
    %691 = vmatpush.bf16.msra.mxu0 %v667
    %692 = vmatpush.bf16.msra.mxu0 %v665
    %693 = vmatpush.bf16.msra.mxu0 %v663
    %694 = vmatpush.bf16.msra.mxu0 %v661
    %695 = vmatpush.bf16.msra.mxu0 %v659
    %696 = vmatpush.bf16.msra.mxu0 %v657
    %697 = vmatmul.bf16.gmra.mxu0 %v589
    %v698 = vpop.f32.mrf.mxu0
    %v699 = vadd.f32 %v605, %v698
    %v700 = vpop.f32.mrf.mxu0
    %v701 = vadd.f32 %v607, %v700
    %702 = vdwg.mxu0
    %703 = vmatpush.bf16.msra.mxu0 %v672
    %704 = vmatpush.bf16.msra.mxu0 %v670
    %705 = vmatpush.bf16.msra.mxu0 %v668
    %706 = vmatpush.bf16.msra.mxu0 %v666
    %707 = vmatpush.bf16.msra.mxu0 %v664
    %708 = vmatpush.bf16.msra.mxu0 %v662
    %709 = vmatpush.bf16.msra.mxu0 %v660
    %710 = vmatpush.bf16.msra.mxu0 %v658
    %711 = vmatmul.bf16.gmra.mxu0 %v589
    %v712 = vpop.f32.mrf.mxu0
    %v713 = vadd.f32 %v606, %v712
    %v714 = vpop.f32.mrf.mxu0
    %v715 = vadd.f32 %v608, %v714
    %716 = vdwg.mxu0
    %v718 = vperm.slane %v582, 0
    %v719 = vperm.slane %v582, 1
    %v722 = vadd.f32 %v699, %v718
    %v723 = vadd.f32 %v713, %v719
    %v724 = vadd.f32 %v701, %v718
    %v725 = vadd.f32 %v715, %v719
    %v726 = vmul.f32 %v722, 0.851
    %v727 = vmul.f32 %v724, 0.851
    %v728 = vtanh.pop %v726
    %v729 = vtanh.pop %v727
    %v730 = vadd.f32 %v728, 1.0
    %v731 = vadd.f32 %v729, 1.0
    %v732 = vmul.f32 %v730, 0.5
    %v733 = vmul.f32 %v731, 0.5
    %v734 = vmul.f32 %v722, %v732
    %v735 = vmul.f32 %v724, %v733
    %v736 = vmul.f32 %v723, 0.851
    %v737 = vmul.f32 %v725, 0.851
    %v738 = vtanh.pop %v736
    %v739 = vtanh.pop %v737
    %v740 = vadd.f32 %v738, 1.0
    %v741 = vadd.f32 %v739, 1.0
    %v742 = vmul.f32 %v740, 0.5
    %v743 = vmul.f32 %v741, 0.5
    %v744 = vmul.f32 %v723, %v742
    %v745 = vmul.f32 %v725, %v743
    %v746 = vpack.c.bf16 %v735, %v734
    %748 = vset.pattern.permute.xlu0 0
    %749 = vperm.xlu0 %748, %v744
    %v750 = vpop.permute.xlu0 %749
    %753 = vset.pattern.permute.xlu0 0
    %754 = vperm.xlu0 %753, %v745
    %v755 = vpop.permute.xlu0 %754
    %v758 = vperm.slane %v588, 0
    %v759 = vperm.slane %v588, 1
    %v762 = vmul.f32 %v750, %v758
    %v763 = vmul.f32 %v750, %v759
    %v764 = vmul.f32 %v755, %v758
    %v765 = vmul.f32 %v755, %v759
    %v782 = vunpack.c.l.b16 %v565
    %v783 = vunpack.c.h.b16 %v565
    %v784 = vunpack.c.l.b16 %v566
    %v785 = vunpack.c.h.b16 %v566
    %v786 = vunpack.c.l.b16 %v567
    %v787 = vunpack.c.h.b16 %v567
    %v788 = vunpack.c.l.b16 %v568
    %v789 = vunpack.c.h.b16 %v568
    %v790 = vunpack.c.l.b16 %v569
    %v791 = vunpack.c.h.b16 %v569
    %v792 = vunpack.c.l.b16 %v570
    %v793 = vunpack.c.h.b16 %v570
    %v794 = vunpack.c.l.b16 %v571
    %v795 = vunpack.c.h.b16 %v571
    %v796 = vunpack.c.l.b16 %v572
    %v797 = vunpack.c.h.b16 %v572
    %v798 = vunpack.c.l.b16 %v573
    %v799 = vunpack.c.h.b16 %v573
    %v800 = vunpack.c.l.b16 %v574
    %v801 = vunpack.c.h.b16 %v574
    %v802 = vunpack.c.l.b16 %v575
    %v803 = vunpack.c.h.b16 %v575
    %v804 = vunpack.c.l.b16 %v576
    %v805 = vunpack.c.h.b16 %v576
    %v806 = vunpack.c.l.b16 %v577
    %v807 = vunpack.c.h.b16 %v577
    %v808 = vunpack.c.l.b16 %v578
    %v809 = vunpack.c.h.b16 %v578
    %v810 = vunpack.c.l.b16 %v579
    %v811 = vunpack.c.h.b16 %v579
    %v812 = vunpack.c.l.b16 %v580
    %v813 = vunpack.c.h.b16 %v580
    %v814 = vpack.c.b16 %v784, %v782
    %v815 = vpack.c.b16 %v785, %v783
    %v816 = vpack.c.b16 %v788, %v786
    %v817 = vpack.c.b16 %v789, %v787
    %v818 = vpack.c.b16 %v792, %v790
    %v819 = vpack.c.b16 %v793, %v791
    %v820 = vpack.c.b16 %v796, %v794
    %v821 = vpack.c.b16 %v797, %v795
    %v822 = vpack.c.b16 %v800, %v798
    %v823 = vpack.c.b16 %v801, %v799
    %v824 = vpack.c.b16 %v804, %v802
    %v825 = vpack.c.b16 %v805, %v803
    %v826 = vpack.c.b16 %v808, %v806
    %v827 = vpack.c.b16 %v809, %v807
    %v828 = vpack.c.b16 %v812, %v810
    %v829 = vpack.c.b16 %v813, %v811
    %846 = vmatpush.bf16.msra.mxu0 %v828
    %847 = vmatpush.bf16.msra.mxu0 %v826
    %848 = vmatpush.bf16.msra.mxu0 %v824
    %849 = vmatpush.bf16.msra.mxu0 %v822
    %850 = vmatpush.bf16.msra.mxu0 %v820
    %851 = vmatpush.bf16.msra.mxu0 %v818
    %852 = vmatpush.bf16.msra.mxu0 %v816
    %853 = vmatpush.bf16.msra.mxu0 %v814
    %854 = vmatmul.bf16.gmra.mxu0 %v746
    %v855 = vpop.f32.mrf.mxu0
    %v856 = vadd.f32 %v762, %v855
    %v857 = vpop.f32.mrf.mxu0
    %v858 = vadd.f32 %v764, %v857
    %859 = vdwg.mxu0
    %860 = vmatpush.bf16.msra.mxu0 %v829
    %861 = vmatpush.bf16.msra.mxu0 %v827
    %862 = vmatpush.bf16.msra.mxu0 %v825
    %863 = vmatpush.bf16.msra.mxu0 %v823
    %864 = vmatpush.bf16.msra.mxu0 %v821
    %865 = vmatpush.bf16.msra.mxu0 %v819
    %866 = vmatpush.bf16.msra.mxu0 %v817
    %867 = vmatpush.bf16.msra.mxu0 %v815
    %868 = vmatmul.bf16.gmra.mxu0 %v746
    %v869 = vpop.f32.mrf.mxu0
    %v870 = vadd.f32 %v763, %v869
    %v871 = vpop.f32.mrf.mxu0
    %v872 = vadd.f32 %v765, %v871
    %873 = vdwg.mxu0
    %v875 = vperm.slane %v584, 0
    %v876 = vperm.slane %v584, 1
    %v879 = vadd.f32 %v856, %v875
    %v880 = vadd.f32 %v870, %v876
    %v881 = vadd.f32 %v858, %v875
    %v882 = vadd.f32 %v872, %v876
    %v883 = vmul.f32 %v879, 0.851
    %v884 = vmul.f32 %v881, 0.851
    %v885 = vtanh.pop %v883
    %v886 = vtanh.pop %v884
    %v887 = vadd.f32 %v885, 1.0
    %v888 = vadd.f32 %v886, 1.0
    %v889 = vmul.f32 %v887, 0.5
    %v890 = vmul.f32 %v888, 0.5
    %v891 = vmul.f32 %v879, %v889
    %v892 = vmul.f32 %v881, %v890
    %v893 = vadd.f32 %v525, %v891
    %v894 = vadd.f32 %v526, %v892
    %v895 = vmul.f32 %v880, 0.851
    %v896 = vmul.f32 %v882, 0.851
    %v897 = vtanh.pop %v895
    %v898 = vtanh.pop %v896
    %v899 = vadd.f32 %v897, 1.0
    %v900 = vadd.f32 %v898, 1.0
    %v901 = vmul.f32 %v899, 0.5
    %v902 = vmul.f32 %v900, 0.5
    %v903 = vmul.f32 %v880, %v901
    %v904 = vmul.f32 %v882, %v902
    %907 = vrot.lane.b32.xlu0 %v903, 127
    %v908 = vpop.permute.xlu0 %907
    %909 = vrot.lane.b32.xlu0 %v904, 127
    %v910 = vpop.permute.xlu0 %909
    %v913 = vadd.f32 %v545, %v908
    %v914 = vadd.f32 %v546, %v910
    %s915 = scalar_lea.vmem [#allocation7], 512
    %v916 = vld [vmem:[%s915] sm:$0xff]
    %v917 = vld [vmem:[%s915 + $0x8] sm:$0xff]
    %v918 = vld [vmem:[%s915 + $0x10] sm:$0xff]
    %v919 = vld [vmem:[%s915 + $0x18] sm:$0xff]
    %v920 = vld [vmem:[%s915 + $0x20] sm:$0xff]
    %v921 = vld [vmem:[%s915 + $0x28] sm:$0xff]
    %v922 = vld [vmem:[%s915 + $0x30] sm:$0xff]
    %v923 = vld [vmem:[%s915 + $0x38] sm:$0xff]
    %v924 = vld [vmem:[%s915 + $0x40] sm:$0xff]
    %v925 = vld [vmem:[%s915 + $0x48] sm:$0xff]
    %v926 = vld [vmem:[%s915 + $0x50] sm:$0xff]
    %v927 = vld [vmem:[%s915 + $0x58] sm:$0xff]
    %v928 = vld [vmem:[%s915 + $0x60] sm:$0xff]
    %v929 = vld [vmem:[%s915 + $0x68] sm:$0xff]
    %v930 = vld [vmem:[%s915 + $0x70] sm:$0xff]
    %v931 = vld [vmem:[%s915 + $0x78] sm:$0xff]
    %s932 = scalar_lea.vmem [#allocation7], 640
    %v933 = vld [vmem:[%s932] sm:$0xff]
    %v934 = vld [vmem:[%s932 + $0x8] sm:$0xff]
    %v935 = vld [vmem:[%s932 + $0x10] sm:$0xff]
    %v936 = vld [vmem:[%s932 + $0x18] sm:$0xff]
    %v937 = vld [vmem:[%s932 + $0x20] sm:$0xff]
    %v938 = vld [vmem:[%s932 + $0x28] sm:$0xff]
    %v939 = vld [vmem:[%s932 + $0x30] sm:$0xff]
    %v940 = vld [vmem:[%s932 + $0x38] sm:$0xff]
    %v941 = vld [vmem:[%s932 + $0x40] sm:$0xff]
    %v942 = vld [vmem:[%s932 + $0x48] sm:$0xff]
    %v943 = vld [vmem:[%s932 + $0x50] sm:$0xff]
    %v944 = vld [vmem:[%s932 + $0x58] sm:$0xff]
    %v945 = vld [vmem:[%s932 + $0x60] sm:$0xff]
    %v946 = vld [vmem:[%s932 + $0x68] sm:$0xff]
    %v947 = vld [vmem:[%s932 + $0x70] sm:$0xff]
    %v948 = vld [vmem:[%s932 + $0x78] sm:$0xff]
    %s949 = scalar_lea.vmem [#allocation8], 5
    %v950 = vld [vmem:[%s949] ss:$8 sm:$0x3]
    %s951 = scalar_lea.vmem [#allocation8], 6
    %v952 = vld [vmem:[%s951] ss:$8 sm:$0x3]
    %s953 = scalar_lea.vmem [#allocation8], 21
    %v954 = vld [vmem:[%s953] ss:$8 sm:$0x3]
    %s955 = scalar_lea.vmem [#allocation8], 22
    %v956 = vld [vmem:[%s955] ss:$8 sm:$0x3]
    %v957 = vpack.c.bf16 %v894, %v893
    %959 = vset.pattern.permute.xlu0 127
    %960 = vperm.xlu0 %959, %v913
    %v961 = vpop.permute.xlu0 %960
    %964 = vset.pattern.permute.xlu0 127
    %965 = vperm.xlu0 %964, %v914
    %v966 = vpop.permute.xlu0 %965
    %v969 = vperm.slane %v954, 0
    %v970 = vperm.slane %v954, 1
    %v973 = vmul.f32 %v961, %v969
    %v974 = vmul.f32 %v961, %v970
    %v975 = vmul.f32 %v966, %v969
    %v976 = vmul.f32 %v966, %v970
    %v993 = vunpack.c.l.b16 %v916
    %v994 = vunpack.c.h.b16 %v916
    %v995 = vunpack.c.l.b16 %v917
    %v996 = vunpack.c.h.b16 %v917
    %v997 = vunpack.c.l.b16 %v918
    %v998 = vunpack.c.h.b16 %v918
    %v999 = vunpack.c.l.b16 %v919
    %v1000 = vunpack.c.h.b16 %v919
    %v1001 = vunpack.c.l.b16 %v920
    %v1002 = vunpack.c.h.b16 %v920
    %v1003 = vunpack.c.l.b16 %v921
    %v1004 = vunpack.c.h.b16 %v921
    %v1005 = vunpack.c.l.b16 %v922
    %v1006 = vunpack.c.h.b16 %v922
    %v1007 = vunpack.c.l.b16 %v923
    %v1008 = vunpack.c.h.b16 %v923
    %v1009 = vunpack.c.l.b16 %v924
    %v1010 = vunpack.c.h.b16 %v924
    %v1011 = vunpack.c.l.b16 %v925
    %v1012 = vunpack.c.h.b16 %v925
    %v1013 = vunpack.c.l.b16 %v926
    %v1014 = vunpack.c.h.b16 %v926
    %v1015 = vunpack.c.l.b16 %v927
    %v1016 = vunpack.c.h.b16 %v927
    %v1017 = vunpack.c.l.b16 %v928
    %v1018 = vunpack.c.h.b16 %v928
    %v1019 = vunpack.c.l.b16 %v929
    %v1020 = vunpack.c.h.b16 %v929
    %v1021 = vunpack.c.l.b16 %v930
    %v1022 = vunpack.c.h.b16 %v930
    %v1023 = vunpack.c.l.b16 %v931
    %v1024 = vunpack.c.h.b16 %v931
    %v1025 = vpack.c.b16 %v995, %v993
    %v1026 = vpack.c.b16 %v996, %v994
    %v1027 = vpack.c.b16 %v999, %v997
    %v1028 = vpack.c.b16 %v1000, %v998
    %v1029 = vpack.c.b16 %v1003, %v1001
    %v1030 = vpack.c.b16 %v1004, %v1002
    %v1031 = vpack.c.b16 %v1007, %v1005
    %v1032 = vpack.c.b16 %v1008, %v1006
    %v1033 = vpack.c.b16 %v1011, %v1009
    %v1034 = vpack.c.b16 %v1012, %v1010
    %v1035 = vpack.c.b16 %v1015, %v1013
    %v1036 = vpack.c.b16 %v1016, %v1014
    %v1037 = vpack.c.b16 %v1019, %v1017
    %v1038 = vpack.c.b16 %v1020, %v1018
    %v1039 = vpack.c.b16 %v1023, %v1021
    %v1040 = vpack.c.b16 %v1024, %v1022
    %1057 = vmatpush.bf16.msra.mxu0 %v1039
    %1058 = vmatpush.bf16.msra.mxu0 %v1037
    %1059 = vmatpush.bf16.msra.mxu0 %v1035
    %1060 = vmatpush.bf16.msra.mxu0 %v1033
    %1061 = vmatpush.bf16.msra.mxu0 %v1031
    %1062 = vmatpush.bf16.msra.mxu0 %v1029
    %1063 = vmatpush.bf16.msra.mxu0 %v1027
    %1064 = vmatpush.bf16.msra.mxu0 %v1025
    %1065 = vmatmul.bf16.gmra.mxu0 %v957
    %v1066 = vpop.f32.mrf.mxu0
    %v1067 = vadd.f32 %v973, %v1066
    %v1068 = vpop.f32.mrf.mxu0
    %v1069 = vadd.f32 %v975, %v1068
    %1070 = vdwg.mxu0
    %1071 = vmatpush.bf16.msra.mxu0 %v1040
    %1072 = vmatpush.bf16.msra.mxu0 %v1038
    %1073 = vmatpush.bf16.msra.mxu0 %v1036
    %1074 = vmatpush.bf16.msra.mxu0 %v1034
    %1075 = vmatpush.bf16.msra.mxu0 %v1032
    %1076 = vmatpush.bf16.msra.mxu0 %v1030
    %1077 = vmatpush.bf16.msra.mxu0 %v1028
    %1078 = vmatpush.bf16.msra.mxu0 %v1026
    %1079 = vmatmul.bf16.gmra.mxu0 %v957
    %v1080 = vpop.f32.mrf.mxu0
    %v1081 = vadd.f32 %v974, %v1080
    %v1082 = vpop.f32.mrf.mxu0
    %v1083 = vadd.f32 %v976, %v1082
    %1084 = vdwg.mxu0
    %v1086 = vperm.slane %v950, 0
    %v1087 = vperm.slane %v950, 1
    %v1090 = vadd.f32 %v1067, %v1086
    %v1091 = vadd.f32 %v1081, %v1087
    %v1092 = vadd.f32 %v1069, %v1086
    %v1093 = vadd.f32 %v1083, %v1087
    %v1094 = vmul.f32 %v1090, 0.851
    %v1095 = vmul.f32 %v1092, 0.851
    %v1096 = vtanh.pop %v1094
    %v1097 = vtanh.pop %v1095
    %v1098 = vadd.f32 %v1096, 1.0
    %v1099 = vadd.f32 %v1097, 1.0
    %v1100 = vmul.f32 %v1098, 0.5
    %v1101 = vmul.f32 %v1099, 0.5
    %v1102 = vmul.f32 %v1090, %v1100
    %v1103 = vmul.f32 %v1092, %v1101
    %v1104 = vmul.f32 %v1091, 0.851
    %v1105 = vmul.f32 %v1093, 0.851
    %v1106 = vtanh.pop %v1104
    %v1107 = vtanh.pop %v1105
    %v1108 = vadd.f32 %v1106, 1.0
    %v1109 = vadd.f32 %v1107, 1.0
    %v1110 = vmul.f32 %v1108, 0.5
    %v1111 = vmul.f32 %v1109, 0.5
    %v1112 = vmul.f32 %v1091, %v1110
    %v1113 = vmul.f32 %v1093, %v1111
    %v1114 = vpack.c.bf16 %v1103, %v1102
    %1116 = vset.pattern.permute.xlu0 0
    %1117 = vperm.xlu0 %1116, %v1112
    %v1118 = vpop.permute.xlu0 %1117
    %1121 = vset.pattern.permute.xlu0 0
    %1122 = vperm.xlu0 %1121, %v1113
    %v1123 = vpop.permute.xlu0 %1122
    %v1126 = vperm.slane %v956, 0
    %v1127 = vperm.slane %v956, 1
    %v1130 = vmul.f32 %v1118, %v1126
    %v1131 = vmul.f32 %v1118, %v1127
    %v1132 = vmul.f32 %v1123, %v1126
    %v1133 = vmul.f32 %v1123, %v1127
    %v1150 = vunpack.c.l.b16 %v933
    %v1151 = vunpack.c.h.b16 %v933
    %v1152 = vunpack.c.l.b16 %v934
    %v1153 = vunpack.c.h.b16 %v934
    %v1154 = vunpack.c.l.b16 %v935
    %v1155 = vunpack.c.h.b16 %v935
    %v1156 = vunpack.c.l.b16 %v936
    %v1157 = vunpack.c.h.b16 %v936
    %v1158 = vunpack.c.l.b16 %v937
    %v1159 = vunpack.c.h.b16 %v937
    %v1160 = vunpack.c.l.b16 %v938
    %v1161 = vunpack.c.h.b16 %v938
    %v1162 = vunpack.c.l.b16 %v939
    %v1163 = vunpack.c.h.b16 %v939
    %v1164 = vunpack.c.l.b16 %v940
    %v1165 = vunpack.c.h.b16 %v940
    %v1166 = vunpack.c.l.b16 %v941
    %v1167 = vunpack.c.h.b16 %v941
    %v1168 = vunpack.c.l.b16 %v942
    %v1169 = vunpack.c.h.b16 %v942
    %v1170 = vunpack.c.l.b16 %v943
    %v1171 = vunpack.c.h.b16 %v943
    %v1172 = vunpack.c.l.b16 %v944
    %v1173 = vunpack.c.h.b16 %v944
    %v1174 = vunpack.c.l.b16 %v945
    %v1175 = vunpack.c.h.b16 %v945
    %v1176 = vunpack.c.l.b16 %v946
    %v1177 = vunpack.c.h.b16 %v946
    %v1178 = vunpack.c.l.b16 %v947
    %v1179 = vunpack.c.h.b16 %v947
    %v1180 = vunpack.c.l.b16 %v948
    %v1181 = vunpack.c.h.b16 %v948
    %v1182 = vpack.c.b16 %v1152, %v1150
    %v1183 = vpack.c.b16 %v1153, %v1151
    %v1184 = vpack.c.b16 %v1156, %v1154
    %v1185 = vpack.c.b16 %v1157, %v1155
    %v1186 = vpack.c.b16 %v1160, %v1158
    %v1187 = vpack.c.b16 %v1161, %v1159
    %v1188 = vpack.c.b16 %v1164, %v1162
    %v1189 = vpack.c.b16 %v1165, %v1163
    %v1190 = vpack.c.b16 %v1168, %v1166
    %v1191 = vpack.c.b16 %v1169, %v1167
    %v1192 = vpack.c.b16 %v1172, %v1170
    %v1193 = vpack.c.b16 %v1173, %v1171
    %v1194 = vpack.c.b16 %v1176, %v1174
    %v1195 = vpack.c.b16 %v1177, %v1175
    %v1196 = vpack.c.b16 %v1180, %v1178
    %v1197 = vpack.c.b16 %v1181, %v1179
    %1214 = vmatpush.bf16.msra.mxu0 %v1196
    %1215 = vmatpush.bf16.msra.mxu0 %v1194
    %1216 = vmatpush.bf16.msra.mxu0 %v1192
    %1217 = vmatpush.bf16.msra.mxu0 %v1190
    %1218 = vmatpush.bf16.msra.mxu0 %v1188
    %1219 = vmatpush.bf16.msra.mxu0 %v1186
    %1220 = vmatpush.bf16.msra.mxu0 %v1184
    %1221 = vmatpush.bf16.msra.mxu0 %v1182
    %1222 = vmatmul.bf16.gmra.mxu0 %v1114
    %v1223 = vpop.f32.mrf.mxu0
    %v1224 = vadd.f32 %v1130, %v1223
    %v1225 = vpop.f32.mrf.mxu0
    %v1226 = vadd.f32 %v1132, %v1225
    %1227 = vdwg.mxu0
    %1228 = vmatpush.bf16.msra.mxu0 %v1197
    %1229 = vmatpush.bf16.msra.mxu0 %v1195
    %1230 = vmatpush.bf16.msra.mxu0 %v1193
    %1231 = vmatpush.bf16.msra.mxu0 %v1191
    %1232 = vmatpush.bf16.msra.mxu0 %v1189
    %1233 = vmatpush.bf16.msra.mxu0 %v1187
    %1234 = vmatpush.bf16.msra.mxu0 %v1185
    %1235 = vmatpush.bf16.msra.mxu0 %v1183
    %1236 = vmatmul.bf16.gmra.mxu0 %v1114
    %v1237 = vpop.f32.mrf.mxu0
    %v1238 = vadd.f32 %v1131, %v1237
    %v1239 = vpop.f32.mrf.mxu0
    %v1240 = vadd.f32 %v1133, %v1239
    %1241 = vdwg.mxu0
    %v1243 = vperm.slane %v952, 0
    %v1244 = vperm.slane %v952, 1
    %v1247 = vadd.f32 %v1224, %v1243
    %v1248 = vadd.f32 %v1238, %v1244
    %v1249 = vadd.f32 %v1226, %v1243
    %v1250 = vadd.f32 %v1240, %v1244
    %v1251 = vmul.f32 %v1247, 0.851
    %v1252 = vmul.f32 %v1249, 0.851
    %v1253 = vtanh.pop %v1251
    %v1254 = vtanh.pop %v1252
    %v1255 = vadd.f32 %v1253, 1.0
    %v1256 = vadd.f32 %v1254, 1.0
    %v1257 = vmul.f32 %v1255, 0.5
    %v1258 = vmul.f32 %v1256, 0.5
    %v1259 = vmul.f32 %v1247, %v1257
    %v1260 = vmul.f32 %v1249, %v1258
    %v1261 = vadd.f32 %v893, %v1259
    %v1262 = vadd.f32 %v894, %v1260
    %v1263 = vmul.f32 %v1248, 0.851
    %v1264 = vmul.f32 %v1250, 0.851
    %v1265 = vtanh.pop %v1263
    %v1266 = vtanh.pop %v1264
    %v1267 = vadd.f32 %v1265, 1.0
    %v1268 = vadd.f32 %v1266, 1.0
    %v1269 = vmul.f32 %v1267, 0.5
    %v1270 = vmul.f32 %v1268, 0.5
    %v1271 = vmul.f32 %v1248, %v1269
    %v1272 = vmul.f32 %v1250, %v1270
    %1275 = vrot.lane.b32.xlu0 %v1271, 127
    %v1276 = vpop.permute.xlu0 %1275
    %1277 = vrot.lane.b32.xlu0 %v1272, 127
    %v1278 = vpop.permute.xlu0 %1277
    %v1281 = vadd.f32 %v913, %v1276
    %v1282 = vadd.f32 %v914, %v1278
    %v1283 = vld [vmem:[#allocation5 + $0x40] sm:$0xf]
    %v1284 = vld [vmem:[#allocation5 + $0x44] sm:$0xf]
    %v1285 = vld [vmem:[#allocation5 + $0x48] sm:$0xf]
    %v1286 = vld [vmem:[#allocation5 + $0x4c] sm:$0xf]
    %v1287 = vld [vmem:[#allocation5 + $0x50] sm:$0xf]
    %v1288 = vld [vmem:[#allocation5 + $0x54] sm:$0xf]
    %v1289 = vld [vmem:[#allocation5 + $0x58] sm:$0xf]
    %v1290 = vld [vmem:[#allocation5 + $0x5c] sm:$0xf]
    %v1291 = vld [vmem:[#allocation5 + $0x60] sm:$0xf]
    %v1292 = vld [vmem:[#allocation5 + $0x64] sm:$0xf]
    %v1293 = vld [vmem:[#allocation5 + $0x68] sm:$0xf]
    %v1294 = vld [vmem:[#allocation5 + $0x6c] sm:$0xf]
    %v1295 = vld [vmem:[#allocation5 + $0x70] sm:$0xf]
    %v1296 = vld [vmem:[#allocation5 + $0x74] sm:$0xf]
    %v1297 = vld [vmem:[#allocation5 + $0x78] sm:$0xf]
    %v1298 = vld [vmem:[#allocation5 + $0x7c] sm:$0xf]
    %v1299 = vld [vmem:[#allocation5 + $0x80] sm:$0xf]
    %v1300 = vld [vmem:[#allocation5 + $0x84] sm:$0xf]
    %v1301 = vld [vmem:[#allocation5 + $0x88] sm:$0xf]
    %v1302 = vld [vmem:[#allocation5 + $0x8c] sm:$0xf]
    %v1303 = vld [vmem:[#allocation5 + $0x90] sm:$0xf]
    %v1304 = vld [vmem:[#allocation5 + $0x94] sm:$0xf]
    %v1305 = vld [vmem:[#allocation5 + $0x98] sm:$0xf]
    %v1306 = vld [vmem:[#allocation5 + $0x9c] sm:$0xf]
    %v1307 = vld [vmem:[#allocation5 + $0xa0] sm:$0xf]
    %v1308 = vld [vmem:[#allocation5 + $0xa4] sm:$0xf]
    %v1309 = vld [vmem:[#allocation5 + $0xa8] sm:$0xf]
    %v1310 = vld [vmem:[#allocation5 + $0xac] sm:$0xf]
    %v1311 = vld [vmem:[#allocation5 + $0xb0] sm:$0xf]
    %v1312 = vld [vmem:[#allocation5 + $0xb4] sm:$0xf]
    %v1313 = vld [vmem:[#allocation5 + $0xb8] sm:$0xf]
    %v1314 = vld [vmem:[#allocation5 + $0xbc] sm:$0xf]
    %v1315 = vld [vmem:[#allocation8 + $0x7] ss:$0 sm:$0xff]
    %v1316 = vld [vmem:[#allocation8 + $0x10] ss:$0 sm:$0xff]
    %v1317 = vld [vmem:[#allocation8 + $0x17] ss:$0 sm:$0xff]
    %v1318 = vpack.c.bf16 %v1262, %v1261
    %1320 = vset.pattern.permute.xlu0 127
    %1321 = vperm.xlu0 %1320, %v1281
    %v1322 = vpop.permute.xlu0 %1321
    %1325 = vset.pattern.permute.xlu0 127
    %1326 = vperm.xlu0 %1325, %v1282
    %v1327 = vpop.permute.xlu0 %1326
    %v1329 = vmul.f32 %v1322, %v1317
    %v1330 = vmul.f32 %v1327, %v1317
    %v1347 = vunpack.c.l.b16 %v1283
    %v1348 = vunpack.c.l.b16 %v1284
    %v1349 = vunpack.c.l.b16 %v1285
    %v1350 = vunpack.c.l.b16 %v1286
    %v1351 = vunpack.c.l.b16 %v1287
    %v1352 = vunpack.c.l.b16 %v1288
    %v1353 = vunpack.c.l.b16 %v1289
    %v1354 = vunpack.c.l.b16 %v1290
    %v1355 = vunpack.c.l.b16 %v1291
    %v1356 = vunpack.c.l.b16 %v1292
    %v1357 = vunpack.c.l.b16 %v1293
    %v1358 = vunpack.c.l.b16 %v1294
    %v1359 = vunpack.c.l.b16 %v1295
    %v1360 = vunpack.c.l.b16 %v1296
    %v1361 = vunpack.c.l.b16 %v1297
    %v1362 = vunpack.c.l.b16 %v1298
    %v1363 = vpack.c.b16 %v1348, %v1347
    %v1364 = vpack.c.b16 %v1350, %v1349
    %v1365 = vpack.c.b16 %v1352, %v1351
    %v1366 = vpack.c.b16 %v1354, %v1353
    %v1367 = vpack.c.b16 %v1356, %v1355
    %v1368 = vpack.c.b16 %v1358, %v1357
    %v1369 = vpack.c.b16 %v1360, %v1359
    %v1370 = vpack.c.b16 %v1362, %v1361
    %1379 = vmatpush.bf16.msra.mxu0 %v1370
    %1380 = vmatpush.bf16.msra.mxu0 %v1369
    %1381 = vmatpush.bf16.msra.mxu0 %v1368
    %1382 = vmatpush.bf16.msra.mxu0 %v1367
    %1383 = vmatpush.bf16.msra.mxu0 %v1366
    %1384 = vmatpush.bf16.msra.mxu0 %v1365
    %1385 = vmatpush.bf16.msra.mxu0 %v1364
    %1386 = vmatpush.bf16.msra.mxu0 %v1363
    %1387 = vmatmul.bf16.gmra.mxu0 %v1318
    %v1388 = vpop.f32.mrf.mxu0
    %v1389 = vadd.f32 %v1329, %v1388
    %v1390 = vpop.f32.mrf.mxu0
    %v1391 = vadd.f32 %v1330, %v1390
    %1392 = vdwg.mxu0
    %v1393 = vadd.f32 %v1389, %v1315
    %v1394 = vadd.f32 %v1391, %v1315
    %v1395 = vmul.f32 %v1393, 0.851
    %v1396 = vmul.f32 %v1394, 0.851
    %v1397 = vtanh.pop %v1395
    %v1398 = vtanh.pop %v1396
    %v1399 = vadd.f32 %v1397, 1.0
    %v1400 = vadd.f32 %v1398, 1.0
    %v1401 = vmul.f32 %v1399, 0.5
    %v1402 = vmul.f32 %v1400, 0.5
    %v1403 = vmul.f32 %v1393, %v1401
    %v1404 = vmul.f32 %v1394, %v1402
    %v1405 = vpack.c.bf16 %v1404, %v1403
    %v1422 = vunpack.c.l.b16 %v1299
    %v1423 = vunpack.c.l.b16 %v1300
    %v1424 = vunpack.c.l.b16 %v1301
    %v1425 = vunpack.c.l.b16 %v1302
    %v1426 = vunpack.c.l.b16 %v1303
    %v1427 = vunpack.c.l.b16 %v1304
    %v1428 = vunpack.c.l.b16 %v1305
    %v1429 = vunpack.c.l.b16 %v1306
    %v1430 = vunpack.c.l.b16 %v1307
    %v1431 = vunpack.c.l.b16 %v1308
    %v1432 = vunpack.c.l.b16 %v1309
    %v1433 = vunpack.c.l.b16 %v1310
    %v1434 = vunpack.c.l.b16 %v1311
    %v1435 = vunpack.c.l.b16 %v1312
    %v1436 = vunpack.c.l.b16 %v1313
    %v1437 = vunpack.c.l.b16 %v1314
    %v1438 = vpack.c.b16 %v1423, %v1422
    %v1439 = vpack.c.b16 %v1425, %v1424
    %v1440 = vpack.c.b16 %v1427, %v1426
    %v1441 = vpack.c.b16 %v1429, %v1428
    %v1442 = vpack.c.b16 %v1431, %v1430
    %v1443 = vpack.c.b16 %v1433, %v1432
    %v1444 = vpack.c.b16 %v1435, %v1434
    %v1445 = vpack.c.b16 %v1437, %v1436
    %1454 = vmatpush.bf16.msra.mxu0 %v1445
    %1455 = vmatpush.bf16.msra.mxu0 %v1444
    %1456 = vmatpush.bf16.msra.mxu0 %v1443
    %1457 = vmatpush.bf16.msra.mxu0 %v1442
    %1458 = vmatpush.bf16.msra.mxu0 %v1441
    %1459 = vmatpush.bf16.msra.mxu0 %v1440
    %1460 = vmatpush.bf16.msra.mxu0 %v1439
    %1461 = vmatpush.bf16.msra.mxu0 %v1438
    %1462 = vmatmul.bf16.gmra.mxu0 %v1405
    %v1463 = vpop.f32.mrf.mxu0
    %v1464 = vadd.f32 %v1316, %v1463
    %v1465 = vpop.f32.mrf.mxu0
    %v1466 = vadd.f32 %v1316, %v1465
    %1467 = vdwg.mxu0
    %v1468 = vpack.c.bf16 %v1464, %v1464
    %v1469 = vpack.c.bf16 %v1466, %v1466
    %1470 = vst [vmem:[#allocation10] sm:$0xf] %v1468
    %1471 = vst [vmem:[#allocation10 + $0x4] sm:$0xf] %v1469
    // Predicated region
    $region34: #{tpu_custom_call.1} parent=1 // pred_check
      _
    $region35: #{tpu_custom_call.1} parent=1 // pred_check_branch
      %1473 = sbr.rel (0) target = $region37
    $region36: #{tpu_custom_call.1} parent=1 // pred_region
      %1475 = vsyncadd [#allocation4], 0
      %s1476 = sshll.u32 [#allocation10], 4
      %s1477 = int_to_ptr.vmem [resolvable:$true] %s1476
      %s1478 = sshll.u32 %s4, 4
      %s1479 = int_to_ptr.hbm [resolvable:$true] %s1478
      %1484 = dma.vmem_to_hbm [thread:$0]  %s1477, 128, %s1479, [#allocation4], 64, 64, 4
    $region37: #{tpu_custom_call.1} parent=1 // pred_fallthru
      _
    // Predicated region
    $region38: #{tpu_custom_call.1} parent=1 // pred_check
      _
    $region39: #{tpu_custom_call.1} parent=1 // pred_check_branch
      %1486 = sbr.rel (0) target = $region41
    $region40: #{tpu_custom_call.1} parent=1 // pred_region
      %1488 = dma.done [#allocation4], 128
    $region41: #{tpu_custom_call.1} parent=1 // pred_fallthru
      _
    %1489 = vsyncpa [#allocation3], 1
    %1490 = vsyncpa [#allocation6], 1
    %1491 = vsyncpa [#allocation9], 1
    %1492 = vsyncpa [#allocation4], 1

</llo_original>
